<compile_context>
chip_gen: v6e
topology: v6e:2x2x1
jax: 0.10.0
libtpu: 0.0.40
codegen_flags: <defaults>
</compile_context>

<pallas_src>
import functools

import jax
import jax.numpy as jnp
from jax.experimental import pallas as pl
from jax.experimental.pallas import tpu as pltpu


# ---------------------------------------------------------------------------
# GradReverse: identity forward, -constant * grad backward. `constant` is a
# non-differentiable argument (matches PyTorch, which returns None for it).
# ---------------------------------------------------------------------------
@functools.partial(jax.custom_vjp, nondiff_argnums=(1,))
def grad_reverse(x, constant):
    return x


def _gr_fwd(x, constant):
    return x, None


def _gr_bwd(constant, _, g):
    return (-constant * g,)


grad_reverse.defvjp(_gr_fwd, _gr_bwd)


# ---------------------------------------------------------------------------
# Pallas kernel: streamed GAP (mean over L, native NCL layout) -> Linear ->
# softmax (+ raw logits).
# ---------------------------------------------------------------------------
def _head_kernel(x_ref, w_ref, b_ref, probs_ref, logits_ref, acc_ref, *,
                 num_classes, seq_len, tile_l, acc_l, need_l_mask):
    l = pl.program_id(1)

    @pl.when(l == 0)
    def _():
        acc_ref[...] = jnp.zeros_like(acc_ref)

    # Stream the (TILE_N, C, TILE_L) tile in 128-lane chunks; pure VPU adds into
    # the f32 accumulator.  1/L folded here so the accumulator holds partial means.
    inv_l = 1.0 / seq_len
    n_chunks = tile_l // acc_l
    if need_l_mask:
        lane = jax.lax.broadcasted_iota(jnp.int32, acc_ref.shape, 2)
    for j in range(n_chunks):
        chunk = x_ref[:, :, j * acc_l:(j + 1) * acc_l].astype(jnp.float32) * inv_l
        if need_l_mask:
            # Zero out lanes past the true sequence length (partial last tile /
            # clamped DMA garbage).  `where` selects, so garbage can't propagate.
            global_l = l * tile_l + j * acc_l + lane
            chunk = jnp.where(global_l < seq_len, chunk, 0.0)
        acc_ref[...] += chunk

    @pl.when(l == pl.num_programs(1) - 1)
    def _():
        # Single XLU lane-reduce per N tile (NOT per L step) -> (TILE_N, C).
        gap = jnp.sum(acc_ref[...], axis=-1)
        logits = jnp.dot(gap, w_ref[...],
                         preferred_element_type=jnp.float32) + b_ref[...]   # (TILE_N, K_pad)
        # Softmax over the real class columns only; padded columns -> -inf -> prob 0.
        col = jax.lax.broadcasted_iota(jnp.int32, logits.shape, 1)
        masked = jnp.where(col < num_classes, logits, -jnp.inf)
        m = jnp.max(masked, axis=-1, keepdims=True)
        e = jnp.exp(masked - m)
        denom = jnp.sum(e, axis=-1, keepdims=True)
        probs = e / denom                      # exact reciprocal: once per N tile, hidden under DMA
        logits_ref[...] = logits.astype(logits_ref.dtype)
        probs_ref[...] = probs.astype(probs_ref.dtype)


def _round_up(v, m):
    return ((v + m - 1) // m) * m


def _cdiv(a, b):
    return (a + b - 1) // b


def fcn_head_forward(x, w, b, constant=1.0, reverse_grad=True,
                     tile_n=128, tile_l=256):
    """x: (N, C, L) channels-first, w: (K, C) PyTorch-Linear weight, b: (K,)."""
    if reverse_grad:
        x = grad_reverse(x, constant)

    N, C, L = x.shape
    K = w.shape[0]

    # Tiny host-side weight prep (128 x K): transpose + pad K to 128 lanes.
    K_pad = max(_round_up(K, 128), 128)
    w_pad = jnp.zeros((C, K_pad), jnp.float32).at[:, :K].set(
        jnp.transpose(w).astype(jnp.float32))
    b_pad = jnp.zeros((1, K_pad), jnp.float32).at[0, :K].set(
        b.astype(jnp.float32))

    # ---- N tiling (parallel axis) ----
    TILE_N = max(min(int(tile_n), _round_up(N, 8)), 8)
    num_n = _cdiv(N, TILE_N)
    # Megacore: make sure the parallel axis has >= 2 tiles when the batch allows it,
    # so both TensorCores (v7x) stream.
    if num_n < 2 and N > 8:
        TILE_N = _round_up(_cdiv(N, 2), 8)
        num_n = _cdiv(N, TILE_N)

    # ---- L tiling (streamed reduction axis, last in the grid) ----
    if L <= 128:
        TILE_L = L                                   # single tile, full dim
    else:
        TILE_L = min(_round_up(int(tile_l), 128), _round_up(L, 128))
    num_l = _cdiv(L, TILE_L)
    ACC_L = min(TILE_L, 128)
    need_l_mask = (L % TILE_L) != 0

    N_out = num_n * TILE_N
    grid = (num_n, num_l)

    kernel = functools.partial(
        _head_kernel, num_classes=K, seq_len=L,
        tile_l=TILE_L, acc_l=ACC_L, need_l_mask=need_l_mask)

    # VMEM budget: 2x input block (double-buffered) + accumulator + weights/outputs
    # + slack.  Default (128x128x256 f32) -> ~48 MiB, within v7x's 64 MiB VMEM.
    x_bytes = TILE_N * C * TILE_L * x.dtype.itemsize
    acc_bytes = TILE_N * C * ACC_L * 4
    small_bytes = 2 * (C + 1) * K_pad * 4 + 2 * 2 * TILE_N * K_pad * 4
    vmem_limit = int(min(max(2 * x_bytes + acc_bytes + small_bytes + (8 << 20),
                             32 << 20), 100 << 20))

    probs, logits = pl.pallas_call(
        kernel,
        out_shape=(
            jax.ShapeDtypeStruct((N_out, K_pad), jnp.float32),
            jax.ShapeDtypeStruct((N_out, K_pad), jnp.float32),
        ),
        grid=grid,
        in_specs=[
            # Native (N, C, L) layout: no host transpose, no host pad.
            pl.BlockSpec((TILE_N, C, TILE_L), lambda n, l: (n, 0, l)),
            pl.BlockSpec((C, K_pad), lambda n, l: (0, 0)),
            pl.BlockSpec((1, K_pad), lambda n, l: (0, 0)),
        ],
        out_specs=[
            pl.BlockSpec((TILE_N, K_pad), lambda n, l: (n, 0)),
            pl.BlockSpec((TILE_N, K_pad), lambda n, l: (n, 0)),
        ],
        scratch_shapes=[pltpu.VMEM((TILE_N, C, ACC_L), jnp.float32)],
        compiler_params=pltpu.CompilerParams(
            dimension_semantics=("parallel", "arbitrary"),
            vmem_limit_bytes=vmem_limit,
        ),
    )(x, w_pad, b_pad)

    # Padded N rows / padded K columns are garbage/zero by construction; slice off.
    return probs[:N, :K], logits[:N, :K]


# ---------------------------------------------------------------------------
# Demo / correctness checks
# ---------------------------------------------------------------------------
def _reference(x, w, b):
    gap = jnp.mean(x, axis=-1)
    logits = gap @ w.T + b
    return jax.nn.softmax(logits, axis=1), logits


if __name__ == "__main__":
    key = jax.random.PRNGKey(0)

    # ---- Test 1: small shapes (head_nf=128 is fixed by FCNPlus(layers=[128,256,128])) ----
    N, C, L, K = 2, 128, 16, 2
    kx, kw, kb, key = jax.random.split(key, 4)
    x = jax.random.normal(kx, (N, C, L), dtype=jnp.float32)
    w = jax.random.normal(kw, (K, C), dtype=jnp.float32) * (2.0 / C) ** 0.5
    b = jax.random.normal(kb, (K,), dtype=jnp.float32) * 0.01

    probs, logits = jax.block_until_ready(
        fcn_head_forward(x, w, b, constant=1.0, reverse_grad=True))
    probs_ref, logits_ref = _reference(x, w, b)
    assert probs.shape == (N, K) and logits.shape == (N, K)
    assert jnp.allclose(logits, logits_ref, atol=5e-4, rtol=5e-4)
    assert jnp.allclose(probs, probs_ref, atol=1e-3, rtol=1e-3)
    assert jnp.allclose(jnp.sum(probs, axis=1), 1.0, atol=1e-4)

    # ---- Test 2: exercises multi-tile N (megacore split), multi-tile L with a
    # partial last tile (in-kernel masking) and the chunked accumulation path.
    N2, L2, K2 = 20, 300, 3
    kx, kw, kb, key = jax.random.split(key, 4)
    x2 = jax.random.normal(kx, (N2, C, L2), dtype=jnp.float32)
    w2 = jax.random.normal(kw, (K2, C), dtype=jnp.float32) * (2.0 / C) ** 0.5
    b2 = jax.random.normal(kb, (K2,), dtype=jnp.float32) * 0.01

    probs2, logits2 = jax.block_until_ready(
        fcn_head_forward(x2, w2, b2, constant=0.5, reverse_grad=False))
    probs2_ref, logits2_ref = _reference(x2, w2, b2)
    assert probs2.shape == (N2, K2) and logits2.shape == (N2, K2)
    assert jnp.allclose(logits2, logits2_ref, atol=5e-4, rtol=5e-4)
    assert jnp.allclose(probs2, probs2_ref, atol=1e-3, rtol=1e-3)
    assert jnp.allclose(jnp.sum(probs2, axis=1), 1.0, atol=1e-4)

    print("KERNEL_OK")
</pallas_src>

<mosaic_0001>
module attributes {stable_mosaic.version = 11 : i64} {
  func.func @_head_kernel(%arg0: i32, %arg1: i32, %arg2: memref<8x128x16xf32, #tpu.memory_space<vmem>>, %arg3: memref<128x128xf32, #tpu.memory_space<vmem>>, %arg4: memref<1x128xf32, #tpu.memory_space<vmem>>, %arg5: memref<8x128xf32, #tpu.memory_space<vmem>>, %arg6: memref<8x128xf32, #tpu.memory_space<vmem>>, %arg7: memref<8x128x16xf32, #tpu.memory_space<vmem>>) attributes {dimension_semantics = [#tpu.dimension_semantics<parallel>, #tpu.dimension_semantics<arbitrary>], iteration_bounds = array<i64: 1, 1>, scalar_prefetch = 0 : i64, scratch_operands = 1 : i64, tpu.core_type = #tpu.core_type<tc>, window_params = [{transform_indices = @transform_0, window_bounds = array<i64: 8, 128, 16>}, {pipeline_mode = #tpu.pipeline_mode<synchronous>, transform_indices = @transform_1, window_bounds = array<i64: 128, 128>}, {pipeline_mode = #tpu.pipeline_mode<synchronous>, transform_indices = @transform_2, window_bounds = array<i64: 1, 128>}, {transform_indices = @transform_3, window_bounds = array<i64: 8, 128>}, {transform_indices = @transform_4, window_bounds = array<i64: 8, 128>}]} {
    %c0_i32 = arith.constant 0 : i32
    %0 = arith.cmpi eq, %arg1, %c0_i32 : i32
    %1 = arith.extui %0 : i1 to i32
    %c0_i32_0 = arith.constant 0 : i32
    %2 = arith.cmpi ne, %1, %c0_i32_0 : i32
    scf.if %2 {
      %cst_11 = arith.constant 0.000000e+00 : f32
      %12 = vector.broadcast %cst_11 : f32 to vector<8x128x16xf32>
      %c0_12 = arith.constant 0 : index
      %c0_13 = arith.constant 0 : index
      %c0_14 = arith.constant 0 : index
      %13 = vector.load %arg7[%c0_12, %c0_13, %c0_14] : memref<8x128x16xf32, #tpu.memory_space<vmem>>, vector<8x128x16xf32>
      tpu.vector_store %arg7[%c0_12, %c0_13, %c0_14], %12 {strides = array<i32>} : memref<8x128x16xf32, #tpu.memory_space<vmem>>, vector<8x128x16xf32>,
    } else {
    }
    %c0 = arith.constant 0 : index
    %c0_1 = arith.constant 0 : index
    %c0_2 = arith.constant 0 : index
    %3 = vector.load %arg2[%c0, %c0_1, %c0_2] : memref<8x128x16xf32, #tpu.memory_space<vmem>>, vector<8x128x16xf32>
    %cst = arith.constant 6.250000e-02 : f32
    %4 = vector.broadcast %cst : f32 to vector<8x128x16xf32>
    %5 = arith.mulf %3, %4 : vector<8x128x16xf32>
    %c0_3 = arith.constant 0 : index
    %c0_4 = arith.constant 0 : index
    %c0_5 = arith.constant 0 : index
    %6 = vector.load %arg7[%c0_3, %c0_4, %c0_5] : memref<8x128x16xf32, #tpu.memory_space<vmem>>, vector<8x128x16xf32>
    %7 = arith.addf %6, %5 : vector<8x128x16xf32>
    %c0_6 = arith.constant 0 : index
    %c0_7 = arith.constant 0 : index
    %c0_8 = arith.constant 0 : index
    %8 = vector.load %arg7[%c0_6, %c0_7, %c0_8] : memref<8x128x16xf32, #tpu.memory_space<vmem>>, vector<8x128x16xf32>
    tpu.vector_store %arg7[%c0_6, %c0_7, %c0_8], %7 {strides = array<i32>} : memref<8x128x16xf32, #tpu.memory_space<vmem>>, vector<8x128x16xf32>,
    %c0_i32_9 = arith.constant 0 : i32
    %9 = arith.cmpi eq, %arg1, %c0_i32_9 : i32
    %10 = arith.extui %9 : i1 to i32
    %c0_i32_10 = arith.constant 0 : i32
    %11 = arith.cmpi ne, %10, %c0_i32_10 : i32
    scf.if %11 {
      %c0_11 = arith.constant 0 : index
      %c0_12 = arith.constant 0 : index
      %c0_13 = arith.constant 0 : index
      %12 = vector.load %arg7[%c0_11, %c0_12, %c0_13] : memref<8x128x16xf32, #tpu.memory_space<vmem>>, vector<8x128x16xf32>
      %cst_14 = arith.constant dense<0.000000e+00> : vector<8x128xf32>
      %13 = vector.multi_reduction <add>, %12, %cst_14 [2] : vector<8x128x16xf32> to vector<8x128xf32>
      %c0_15 = arith.constant 0 : index
      %c0_16 = arith.constant 0 : index
      %14 = vector.load %arg3[%c0_15, %c0_16] : memref<128x128xf32, #tpu.memory_space<vmem>>, vector<128x128xf32>
      %cst_17 = arith.constant dense<0.000000e+00> : vector<8x128xf32>
      %15 = tpu.matmul %13, %14, %cst_17 {dimension_numbers = #tpu.dot_dimension_numbers<[1], [0], [0], [1], [0, 0, 1, 1], [], []>} : vector<8x128xf32>, vector<128x128xf32>, vector<8x128xf32> -> vector<8x128xf32>
      %c0_18 = arith.constant 0 : index
      %c0_19 = arith.constant 0 : index
      %16 = vector.load %arg4[%c0_18, %c0_19] : memref<1x128xf32, #tpu.memory_space<vmem>>, vector<1x128xf32>
      %17 = vector.broadcast %16 : vector<1x128xf32> to vector<8x128xf32>
      %18 = arith.addf %15, %17 : vector<8x128xf32>
      %19 = tpu.iota {dimensions = array<i32: 1>} : vector<8x128xi32>
      %c2_i32 = arith.constant 2 : i32
      %20 = vector.broadcast %c2_i32 : i32 to vector<8x128xi32>
      %21 = arith.cmpi slt, %19, %20 : vector<8x128xi32>
      %cst_20 = arith.constant 0xFF800000 : f32
      %22 = vector.broadcast %cst_20 : f32 to vector<8x128xf32>
      %23 = arith.select %21, %18, %22 : vector<8x128xi1>, vector<8x128xf32>
      %cst_21 = arith.constant dense<0xFF800000> : vector<8xf32>
      %24 = vector.multi_reduction <maximumf>, %23, %cst_21 [1] : vector<8x128xf32> to vector<8xf32>
      %25 = vector.shape_cast %24 : vector<8xf32> to vector<8x1xf32>
      %26 = vector.broadcast %25 : vector<8x1xf32> to vector<8x128xf32>
      %27 = arith.subf %23, %26 : vector<8x128xf32>
      %28 = math.exp %27 : vector<8x128xf32>
      %cst_22 = arith.constant dense<0.000000e+00> : vector<8xf32>
      %29 = vector.multi_reduction <add>, %28, %cst_22 [1] : vector<8x128xf32> to vector<8xf32>
      %30 = vector.shape_cast %29 : vector<8xf32> to vector<8x1xf32>
      %31 = vector.broadcast %30 : vector<8x1xf32> to vector<8x128xf32>
      %32 = arith.divf %28, %31 : vector<8x128xf32>
      %c0_23 = arith.constant 0 : index
      %c0_24 = arith.constant 0 : index
      %33 = vector.load %arg6[%c0_23, %c0_24] : memref<8x128xf32, #tpu.memory_space<vmem>>, vector<8x128xf32>
      tpu.vector_store %arg6[%c0_23, %c0_24], %18 {strides = array<i32>} : memref<8x128xf32, #tpu.memory_space<vmem>>, vector<8x128xf32>,
      %c0_25 = arith.constant 0 : index
      %c0_26 = arith.constant 0 : index
      %34 = vector.load %arg5[%c0_25, %c0_26] : memref<8x128xf32, #tpu.memory_space<vmem>>, vector<8x128xf32>
      tpu.vector_store %arg5[%c0_25, %c0_26], %32 {strides = array<i32>} : memref<8x128xf32, #tpu.memory_space<vmem>>, vector<8x128xf32>,
    } else {
    }
    return
  }
  func.func @transform_0(%arg0: i32, %arg1: i32) -> (i32, i32, i32) {
    %c0_i32 = arith.constant 0 : i32
    %c0_i32_0 = arith.constant 0 : i32
    return %arg0, %c0_i32, %arg1 : i32, i32, i32
  }
  func.func @transform_1(%arg0: i32, %arg1: i32) -> (i32, i32) {
    %c0_i32 = arith.constant 0 : i32
    %c0_i32_0 = arith.constant 0 : i32
    %c0_i32_1 = arith.constant 0 : i32
    return %c0_i32, %c0_i32_0 : i32, i32
  }
  func.func @transform_2(%arg0: i32, %arg1: i32) -> (i32, i32) {
    %c0_i32 = arith.constant 0 : i32
    %c0_i32_0 = arith.constant 0 : i32
    %c0_i32_1 = arith.constant 0 : i32
    return %c0_i32, %c0_i32_0 : i32, i32
  }
  func.func @transform_3(%arg0: i32, %arg1: i32) -> (i32, i32) {
    %c0_i32 = arith.constant 0 : i32
    %c0_i32_0 = arith.constant 0 : i32
    return %arg0, %c0_i32 : i32, i32
  }
  func.func @transform_4(%arg0: i32, %arg1: i32) -> (i32, i32) {
    %c0_i32 = arith.constant 0 : i32
    %c0_i32_0 = arith.constant 0 : i32
    return %arg0, %c0_i32 : i32, i32
  }
}

</mosaic_0001>

<llo_original>
// kernel: tpu_custom_call.1
$region0: #{tpu_custom_call.1}
  #allocation0 [shape = 'u32[]', space=smem, size = 0x4, offset = 0x4, fixed_abs, tag = 'smem constant byte address 0x4 - core index']
  #allocation1 [shape = 'u32[144,128]{1,0:T(1,128)}', space=vmem, size = 0x12000, scoped, tag = 'internal scratch']
  #allocation2 [shape = 'f32[8,128,16]{2,1,0:T(8,128)}', space=vmem, size = 0x80000, scoped, tag = 'scratch operand']
  %s0 = inlined_call_operand.vmem [shape: f32[2,128,16], index: 0, kind: input, shape index: {}]
  %s1 = inlined_call_operand.vmem [shape: f32[128,128], index: 1, kind: input, shape index: {}]
  %s2 = inlined_call_operand.vmem [shape: f32[1,128], index: 2, kind: input, shape index: {}]
  %s3 = inlined_call_operand.hbm [shape: f32[8,128], index: 3, kind: output, shape index: {0}]
  %s4 = inlined_call_operand.hbm [shape: f32[8,128], index: 4, kind: output, shape index: {1}]
  %5 = xla_tuple %s3, %s4
  %s6 = sld [smem:[#allocation0]]
  $region38: #{tpu_custom_call.1} parent=0
    _
  %s8 = ssub.s32 1, %s6
  %s9 = scalar_select 0, %s8, %s6
  $region1: #{tpu_custom_call.1} parent=0
    #allocation3 [shape = 'u8[4096]{0}', space=vmem, size = 0x1000, scoped, tag = 'output window, operand 0, single buffered']
    #allocation4 [shape = 's32[1]{0}', space=sflag, size = 0x4, scoped, tag = 'scoped memory for tpu_custom_call.1']
    #allocation5 [shape = 'u8[4096]{0}', space=vmem, size = 0x1000, scoped, tag = 'output window, operand 1, single buffered']
    #allocation6 [shape = 's32[1]{0}', space=sflag, size = 0x4, scoped, tag = 'scoped memory for tpu_custom_call.1']
    %10 = vsyncpa [#allocation4], 0
    %11 = vsyncpa [#allocation6], 0
    // Predicated region
    $region2: #{tpu_custom_call.1} parent=1 // pred_check
      _
    $region3: #{tpu_custom_call.1} parent=1 // pred_check_branch
      %13 = sbr.rel (0) target = $region5
    $region4: #{tpu_custom_call.1} parent=1 // pred_region
      _
    $region5: #{tpu_custom_call.1} parent=1 // pred_fallthru
      _
    // Predicated region
    $region6: #{tpu_custom_call.1} parent=1 // pred_check
      _
    $region7: #{tpu_custom_call.1} parent=1 // pred_check_branch
      %15 = sbr.rel (0) target = $region9
    $region8: #{tpu_custom_call.1} parent=1 // pred_region
      _
    $region9: #{tpu_custom_call.1} parent=1 // pred_fallthru
      _
    // Predicated region
    $region10: #{tpu_custom_call.1} parent=1 // pred_check
      _
    $region11: #{tpu_custom_call.1} parent=1 // pred_check_branch
      %17 = sbr.rel (0) target = $region13
    $region12: #{tpu_custom_call.1} parent=1 // pred_region
      _
    $region13: #{tpu_custom_call.1} parent=1 // pred_fallthru
      _
    %p18 = scmp.eq.s32.totalorder 0, 0
    // Predicated region
    $region14: #{tpu_custom_call.1} parent=1 // pred_check
      %p19 = pneg %p18
    $region15: #{tpu_custom_call.1} parent=1 // pred_check_branch
      %21 = sbr.rel (%p19) target = $region17
    $region16: #{tpu_custom_call.1} parent=1 // pred_region
      %vm22 = vcmask 130048
      %23 = vst.msk [vmem:[#allocation2] sm:$0xff] %vm22, 0.0
      %24 = vst.msk [vmem:[#allocation2 + $0x8] sm:$0xff] %vm22, 0.0
      %25 = vst.msk [vmem:[#allocation2 + $0x10] sm:$0xff] %vm22, 0.0
      %26 = vst.msk [vmem:[#allocation2 + $0x18] sm:$0xff] %vm22, 0.0
      %27 = vst.msk [vmem:[#allocation2 + $0x20] sm:$0xff] %vm22, 0.0
      %28 = vst.msk [vmem:[#allocation2 + $0x28] sm:$0xff] %vm22, 0.0
      %29 = vst.msk [vmem:[#allocation2 + $0x30] sm:$0xff] %vm22, 0.0
      %30 = vst.msk [vmem:[#allocation2 + $0x38] sm:$0xff] %vm22, 0.0
      %31 = vst.msk [vmem:[#allocation2 + $0x40] sm:$0xff] %vm22, 0.0
      %32 = vst.msk [vmem:[#allocation2 + $0x48] sm:$0xff] %vm22, 0.0
      %33 = vst.msk [vmem:[#allocation2 + $0x50] sm:$0xff] %vm22, 0.0
      %34 = vst.msk [vmem:[#allocation2 + $0x58] sm:$0xff] %vm22, 0.0
      %35 = vst.msk [vmem:[#allocation2 + $0x60] sm:$0xff] %vm22, 0.0
      %36 = vst.msk [vmem:[#allocation2 + $0x68] sm:$0xff] %vm22, 0.0
      %37 = vst.msk [vmem:[#allocation2 + $0x70] sm:$0xff] %vm22, 0.0
      %38 = vst.msk [vmem:[#allocation2 + $0x78] sm:$0xff] %vm22, 0.0
      %39 = vst.msk [vmem:[#allocation2 + $0x80] sm:$0xff] %vm22, 0.0
      %40 = vst.msk [vmem:[#allocation2 + $0x88] sm:$0xff] %vm22, 0.0
      %41 = vst.msk [vmem:[#allocation2 + $0x90] sm:$0xff] %vm22, 0.0
      %42 = vst.msk [vmem:[#allocation2 + $0x98] sm:$0xff] %vm22, 0.0
      %43 = vst.msk [vmem:[#allocation2 + $0xa0] sm:$0xff] %vm22, 0.0
      %44 = vst.msk [vmem:[#allocation2 + $0xa8] sm:$0xff] %vm22, 0.0
      %45 = vst.msk [vmem:[#allocation2 + $0xb0] sm:$0xff] %vm22, 0.0
      %46 = vst.msk [vmem:[#allocation2 + $0xb8] sm:$0xff] %vm22, 0.0
      %47 = vst.msk [vmem:[#allocation2 + $0xc0] sm:$0xff] %vm22, 0.0
      %48 = vst.msk [vmem:[#allocation2 + $0xc8] sm:$0xff] %vm22, 0.0
      %49 = vst.msk [vmem:[#allocation2 + $0xd0] sm:$0xff] %vm22, 0.0
      %50 = vst.msk [vmem:[#allocation2 + $0xd8] sm:$0xff] %vm22, 0.0
      %51 = vst.msk [vmem:[#allocation2 + $0xe0] sm:$0xff] %vm22, 0.0
      %52 = vst.msk [vmem:[#allocation2 + $0xe8] sm:$0xff] %vm22, 0.0
      %53 = vst.msk [vmem:[#allocation2 + $0xf0] sm:$0xff] %vm22, 0.0
      %54 = vst.msk [vmem:[#allocation2 + $0xf8] sm:$0xff] %vm22, 0.0
      %55 = vst.msk [vmem:[#allocation2 + $0x100] sm:$0xff] %vm22, 0.0
      %56 = vst.msk [vmem:[#allocation2 + $0x108] sm:$0xff] %vm22, 0.0
      %57 = vst.msk [vmem:[#allocation2 + $0x110] sm:$0xff] %vm22, 0.0
      %58 = vst.msk [vmem:[#allocation2 + $0x118] sm:$0xff] %vm22, 0.0
      %59 = vst.msk [vmem:[#allocation2 + $0x120] sm:$0xff] %vm22, 0.0
      %60 = vst.msk [vmem:[#allocation2 + $0x128] sm:$0xff] %vm22, 0.0
      %61 = vst.msk [vmem:[#allocation2 + $0x130] sm:$0xff] %vm22, 0.0
      %62 = vst.msk [vmem:[#allocation2 + $0x138] sm:$0xff] %vm22, 0.0
      %63 = vst.msk [vmem:[#allocation2 + $0x140] sm:$0xff] %vm22, 0.0
      %64 = vst.msk [vmem:[#allocation2 + $0x148] sm:$0xff] %vm22, 0.0
      %65 = vst.msk [vmem:[#allocation2 + $0x150] sm:$0xff] %vm22, 0.0
      %66 = vst.msk [vmem:[#allocation2 + $0x158] sm:$0xff] %vm22, 0.0
      %67 = vst.msk [vmem:[#allocation2 + $0x160] sm:$0xff] %vm22, 0.0
      %68 = vst.msk [vmem:[#allocation2 + $0x168] sm:$0xff] %vm22, 0.0
      %69 = vst.msk [vmem:[#allocation2 + $0x170] sm:$0xff] %vm22, 0.0
      %70 = vst.msk [vmem:[#allocation2 + $0x178] sm:$0xff] %vm22, 0.0
      %71 = vst.msk [vmem:[#allocation2 + $0x180] sm:$0xff] %vm22, 0.0
      %72 = vst.msk [vmem:[#allocation2 + $0x188] sm:$0xff] %vm22, 0.0
      %73 = vst.msk [vmem:[#allocation2 + $0x190] sm:$0xff] %vm22, 0.0
      %74 = vst.msk [vmem:[#allocation2 + $0x198] sm:$0xff] %vm22, 0.0
      %75 = vst.msk [vmem:[#allocation2 + $0x1a0] sm:$0xff] %vm22, 0.0
      %76 = vst.msk [vmem:[#allocation2 + $0x1a8] sm:$0xff] %vm22, 0.0
      %77 = vst.msk [vmem:[#allocation2 + $0x1b0] sm:$0xff] %vm22, 0.0
      %78 = vst.msk [vmem:[#allocation2 + $0x1b8] sm:$0xff] %vm22, 0.0
      %79 = vst.msk [vmem:[#allocation2 + $0x1c0] sm:$0xff] %vm22, 0.0
      %80 = vst.msk [vmem:[#allocation2 + $0x1c8] sm:$0xff] %vm22, 0.0
      %81 = vst.msk [vmem:[#allocation2 + $0x1d0] sm:$0xff] %vm22, 0.0
      %82 = vst.msk [vmem:[#allocation2 + $0x1d8] sm:$0xff] %vm22, 0.0
      %83 = vst.msk [vmem:[#allocation2 + $0x1e0] sm:$0xff] %vm22, 0.0
      %84 = vst.msk [vmem:[#allocation2 + $0x1e8] sm:$0xff] %vm22, 0.0
      %85 = vst.msk [vmem:[#allocation2 + $0x1f0] sm:$0xff] %vm22, 0.0
      %86 = vst.msk [vmem:[#allocation2 + $0x1f8] sm:$0xff] %vm22, 0.0
      %87 = vst.msk [vmem:[#allocation2 + $0x200] sm:$0xff] %vm22, 0.0
      %88 = vst.msk [vmem:[#allocation2 + $0x208] sm:$0xff] %vm22, 0.0
      %89 = vst.msk [vmem:[#allocation2 + $0x210] sm:$0xff] %vm22, 0.0
      %90 = vst.msk [vmem:[#allocation2 + $0x218] sm:$0xff] %vm22, 0.0
      %91 = vst.msk [vmem:[#allocation2 + $0x220] sm:$0xff] %vm22, 0.0
      %92 = vst.msk [vmem:[#allocation2 + $0x228] sm:$0xff] %vm22, 0.0
      %93 = vst.msk [vmem:[#allocation2 + $0x230] sm:$0xff] %vm22, 0.0
      %94 = vst.msk [vmem:[#allocation2 + $0x238] sm:$0xff] %vm22, 0.0
      %95 = vst.msk [vmem:[#allocation2 + $0x240] sm:$0xff] %vm22, 0.0
      %96 = vst.msk [vmem:[#allocation2 + $0x248] sm:$0xff] %vm22, 0.0
      %97 = vst.msk [vmem:[#allocation2 + $0x250] sm:$0xff] %vm22, 0.0
      %98 = vst.msk [vmem:[#allocation2 + $0x258] sm:$0xff] %vm22, 0.0
      %99 = vst.msk [vmem:[#allocation2 + $0x260] sm:$0xff] %vm22, 0.0
      %100 = vst.msk [vmem:[#allocation2 + $0x268] sm:$0xff] %vm22, 0.0
      %101 = vst.msk [vmem:[#allocation2 + $0x270] sm:$0xff] %vm22, 0.0
      %102 = vst.msk [vmem:[#allocation2 + $0x278] sm:$0xff] %vm22, 0.0
      %103 = vst.msk [vmem:[#allocation2 + $0x280] sm:$0xff] %vm22, 0.0
      %104 = vst.msk [vmem:[#allocation2 + $0x288] sm:$0xff] %vm22, 0.0
      %105 = vst.msk [vmem:[#allocation2 + $0x290] sm:$0xff] %vm22, 0.0
      %106 = vst.msk [vmem:[#allocation2 + $0x298] sm:$0xff] %vm22, 0.0
      %107 = vst.msk [vmem:[#allocation2 + $0x2a0] sm:$0xff] %vm22, 0.0
      %108 = vst.msk [vmem:[#allocation2 + $0x2a8] sm:$0xff] %vm22, 0.0
      %109 = vst.msk [vmem:[#allocation2 + $0x2b0] sm:$0xff] %vm22, 0.0
      %110 = vst.msk [vmem:[#allocation2 + $0x2b8] sm:$0xff] %vm22, 0.0
      %111 = vst.msk [vmem:[#allocation2 + $0x2c0] sm:$0xff] %vm22, 0.0
      %112 = vst.msk [vmem:[#allocation2 + $0x2c8] sm:$0xff] %vm22, 0.0
      %113 = vst.msk [vmem:[#allocation2 + $0x2d0] sm:$0xff] %vm22, 0.0
      %114 = vst.msk [vmem:[#allocation2 + $0x2d8] sm:$0xff] %vm22, 0.0
      %115 = vst.msk [vmem:[#allocation2 + $0x2e0] sm:$0xff] %vm22, 0.0
      %116 = vst.msk [vmem:[#allocation2 + $0x2e8] sm:$0xff] %vm22, 0.0
      %117 = vst.msk [vmem:[#allocation2 + $0x2f0] sm:$0xff] %vm22, 0.0
      %118 = vst.msk [vmem:[#allocation2 + $0x2f8] sm:$0xff] %vm22, 0.0
      %119 = vst.msk [vmem:[#allocation2 + $0x300] sm:$0xff] %vm22, 0.0
      %120 = vst.msk [vmem:[#allocation2 + $0x308] sm:$0xff] %vm22, 0.0
      %121 = vst.msk [vmem:[#allocation2 + $0x310] sm:$0xff] %vm22, 0.0
      %122 = vst.msk [vmem:[#allocation2 + $0x318] sm:$0xff] %vm22, 0.0
      %123 = vst.msk [vmem:[#allocation2 + $0x320] sm:$0xff] %vm22, 0.0
      %124 = vst.msk [vmem:[#allocation2 + $0x328] sm:$0xff] %vm22, 0.0
      %125 = vst.msk [vmem:[#allocation2 + $0x330] sm:$0xff] %vm22, 0.0
      %126 = vst.msk [vmem:[#allocation2 + $0x338] sm:$0xff] %vm22, 0.0
      %127 = vst.msk [vmem:[#allocation2 + $0x340] sm:$0xff] %vm22, 0.0
      %128 = vst.msk [vmem:[#allocation2 + $0x348] sm:$0xff] %vm22, 0.0
      %129 = vst.msk [vmem:[#allocation2 + $0x350] sm:$0xff] %vm22, 0.0
      %130 = vst.msk [vmem:[#allocation2 + $0x358] sm:$0xff] %vm22, 0.0
      %131 = vst.msk [vmem:[#allocation2 + $0x360] sm:$0xff] %vm22, 0.0
      %132 = vst.msk [vmem:[#allocation2 + $0x368] sm:$0xff] %vm22, 0.0
      %133 = vst.msk [vmem:[#allocation2 + $0x370] sm:$0xff] %vm22, 0.0
      %134 = vst.msk [vmem:[#allocation2 + $0x378] sm:$0xff] %vm22, 0.0
      %135 = vst.msk [vmem:[#allocation2 + $0x380] sm:$0xff] %vm22, 0.0
      %136 = vst.msk [vmem:[#allocation2 + $0x388] sm:$0xff] %vm22, 0.0
      %137 = vst.msk [vmem:[#allocation2 + $0x390] sm:$0xff] %vm22, 0.0
      %138 = vst.msk [vmem:[#allocation2 + $0x398] sm:$0xff] %vm22, 0.0
      %139 = vst.msk [vmem:[#allocation2 + $0x3a0] sm:$0xff] %vm22, 0.0
      %140 = vst.msk [vmem:[#allocation2 + $0x3a8] sm:$0xff] %vm22, 0.0
      %141 = vst.msk [vmem:[#allocation2 + $0x3b0] sm:$0xff] %vm22, 0.0
      %142 = vst.msk [vmem:[#allocation2 + $0x3b8] sm:$0xff] %vm22, 0.0
      %143 = vst.msk [vmem:[#allocation2 + $0x3c0] sm:$0xff] %vm22, 0.0
      %144 = vst.msk [vmem:[#allocation2 + $0x3c8] sm:$0xff] %vm22, 0.0
      %145 = vst.msk [vmem:[#allocation2 + $0x3d0] sm:$0xff] %vm22, 0.0
      %146 = vst.msk [vmem:[#allocation2 + $0x3d8] sm:$0xff] %vm22, 0.0
      %147 = vst.msk [vmem:[#allocation2 + $0x3e0] sm:$0xff] %vm22, 0.0
      %148 = vst.msk [vmem:[#allocation2 + $0x3e8] sm:$0xff] %vm22, 0.0
      %149 = vst.msk [vmem:[#allocation2 + $0x3f0] sm:$0xff] %vm22, 0.0
      %150 = vst.msk [vmem:[#allocation2 + $0x3f8] sm:$0xff] %vm22, 0.0
    $region17: #{tpu_custom_call.1} parent=1 // pred_fallthru
      _
    %v151 = vld [vmem:[%s0] sm:$0xff]
    %v152 = vld [vmem:[%s0 + $0x8] sm:$0xff]
    %v153 = vld [vmem:[%s0 + $0x10] sm:$0xff]
    %v154 = vld [vmem:[%s0 + $0x18] sm:$0xff]
    %v155 = vld [vmem:[%s0 + $0x20] sm:$0xff]
    %v156 = vld [vmem:[%s0 + $0x28] sm:$0xff]
    %v157 = vld [vmem:[%s0 + $0x30] sm:$0xff]
    %v158 = vld [vmem:[%s0 + $0x38] sm:$0xff]
    %v159 = vld [vmem:[%s0 + $0x40] sm:$0xff]
    %v160 = vld [vmem:[%s0 + $0x48] sm:$0xff]
    %v161 = vld [vmem:[%s0 + $0x50] sm:$0xff]
    %v162 = vld [vmem:[%s0 + $0x58] sm:$0xff]
    %v163 = vld [vmem:[%s0 + $0x60] sm:$0xff]
    %v164 = vld [vmem:[%s0 + $0x68] sm:$0xff]
    %v165 = vld [vmem:[%s0 + $0x70] sm:$0xff]
    %v166 = vld [vmem:[%s0 + $0x78] sm:$0xff]
    %v167 = vld [vmem:[%s0 + $0x80] sm:$0xff]
    %v168 = vld [vmem:[%s0 + $0x88] sm:$0xff]
    %v169 = vld [vmem:[%s0 + $0x90] sm:$0xff]
    %v170 = vld [vmem:[%s0 + $0x98] sm:$0xff]
    %v171 = vld [vmem:[%s0 + $0xa0] sm:$0xff]
    %v172 = vld [vmem:[%s0 + $0xa8] sm:$0xff]
    %v173 = vld [vmem:[%s0 + $0xb0] sm:$0xff]
    %v174 = vld [vmem:[%s0 + $0xb8] sm:$0xff]
    %v175 = vld [vmem:[%s0 + $0xc0] sm:$0xff]
    %v176 = vld [vmem:[%s0 + $0xc8] sm:$0xff]
    %v177 = vld [vmem:[%s0 + $0xd0] sm:$0xff]
    %v178 = vld [vmem:[%s0 + $0xd8] sm:$0xff]
    %v179 = vld [vmem:[%s0 + $0xe0] sm:$0xff]
    %v180 = vld [vmem:[%s0 + $0xe8] sm:$0xff]
    %v181 = vld [vmem:[%s0 + $0xf0] sm:$0xff]
    %v182 = vld [vmem:[%s0 + $0xf8] sm:$0xff]
    %v183 = vld [vmem:[%s0 + $0x100] sm:$0xff]
    %v184 = vld [vmem:[%s0 + $0x108] sm:$0xff]
    %v185 = vld [vmem:[%s0 + $0x110] sm:$0xff]
    %v186 = vld [vmem:[%s0 + $0x118] sm:$0xff]
    %v187 = vld [vmem:[%s0 + $0x120] sm:$0xff]
    %v188 = vld [vmem:[%s0 + $0x128] sm:$0xff]
    %v189 = vld [vmem:[%s0 + $0x130] sm:$0xff]
    %v190 = vld [vmem:[%s0 + $0x138] sm:$0xff]
    %v191 = vld [vmem:[%s0 + $0x140] sm:$0xff]
    %v192 = vld [vmem:[%s0 + $0x148] sm:$0xff]
    %v193 = vld [vmem:[%s0 + $0x150] sm:$0xff]
    %v194 = vld [vmem:[%s0 + $0x158] sm:$0xff]
    %v195 = vld [vmem:[%s0 + $0x160] sm:$0xff]
    %v196 = vld [vmem:[%s0 + $0x168] sm:$0xff]
    %v197 = vld [vmem:[%s0 + $0x170] sm:$0xff]
    %v198 = vld [vmem:[%s0 + $0x178] sm:$0xff]
    %v199 = vld [vmem:[%s0 + $0x180] sm:$0xff]
    %v200 = vld [vmem:[%s0 + $0x188] sm:$0xff]
    %v201 = vld [vmem:[%s0 + $0x190] sm:$0xff]
    %v202 = vld [vmem:[%s0 + $0x198] sm:$0xff]
    %v203 = vld [vmem:[%s0 + $0x1a0] sm:$0xff]
    %v204 = vld [vmem:[%s0 + $0x1a8] sm:$0xff]
    %v205 = vld [vmem:[%s0 + $0x1b0] sm:$0xff]
    %v206 = vld [vmem:[%s0 + $0x1b8] sm:$0xff]
    %v207 = vld [vmem:[%s0 + $0x1c0] sm:$0xff]
    %v208 = vld [vmem:[%s0 + $0x1c8] sm:$0xff]
    %v209 = vld [vmem:[%s0 + $0x1d0] sm:$0xff]
    %v210 = vld [vmem:[%s0 + $0x1d8] sm:$0xff]
    %v211 = vld [vmem:[%s0 + $0x1e0] sm:$0xff]
    %v212 = vld [vmem:[%s0 + $0x1e8] sm:$0xff]
    %v213 = vld [vmem:[%s0 + $0x1f0] sm:$0xff]
    %v214 = vld [vmem:[%s0 + $0x1f8] sm:$0xff]
    %v215 = vld [vmem:[%s0 + $0x200] sm:$0xff]
    %v216 = vld [vmem:[%s0 + $0x208] sm:$0xff]
    %v217 = vld [vmem:[%s0 + $0x210] sm:$0xff]
    %v218 = vld [vmem:[%s0 + $0x218] sm:$0xff]
    %v219 = vld [vmem:[%s0 + $0x220] sm:$0xff]
    %v220 = vld [vmem:[%s0 + $0x228] sm:$0xff]
    %v221 = vld [vmem:[%s0 + $0x230] sm:$0xff]
    %v222 = vld [vmem:[%s0 + $0x238] sm:$0xff]
    %v223 = vld [vmem:[%s0 + $0x240] sm:$0xff]
    %v224 = vld [vmem:[%s0 + $0x248] sm:$0xff]
    %v225 = vld [vmem:[%s0 + $0x250] sm:$0xff]
    %v226 = vld [vmem:[%s0 + $0x258] sm:$0xff]
    %v227 = vld [vmem:[%s0 + $0x260] sm:$0xff]
    %v228 = vld [vmem:[%s0 + $0x268] sm:$0xff]
    %v229 = vld [vmem:[%s0 + $0x270] sm:$0xff]
    %v230 = vld [vmem:[%s0 + $0x278] sm:$0xff]
    %v231 = vld [vmem:[%s0 + $0x280] sm:$0xff]
    %v232 = vld [vmem:[%s0 + $0x288] sm:$0xff]
    %v233 = vld [vmem:[%s0 + $0x290] sm:$0xff]
    %v234 = vld [vmem:[%s0 + $0x298] sm:$0xff]
    %v235 = vld [vmem:[%s0 + $0x2a0] sm:$0xff]
    %v236 = vld [vmem:[%s0 + $0x2a8] sm:$0xff]
    %v237 = vld [vmem:[%s0 + $0x2b0] sm:$0xff]
    %v238 = vld [vmem:[%s0 + $0x2b8] sm:$0xff]
    %v239 = vld [vmem:[%s0 + $0x2c0] sm:$0xff]
    %v240 = vld [vmem:[%s0 + $0x2c8] sm:$0xff]
    %v241 = vld [vmem:[%s0 + $0x2d0] sm:$0xff]
    %v242 = vld [vmem:[%s0 + $0x2d8] sm:$0xff]
    %v243 = vld [vmem:[%s0 + $0x2e0] sm:$0xff]
    %v244 = vld [vmem:[%s0 + $0x2e8] sm:$0xff]
    %v245 = vld [vmem:[%s0 + $0x2f0] sm:$0xff]
    %v246 = vld [vmem:[%s0 + $0x2f8] sm:$0xff]
    %v247 = vld [vmem:[%s0 + $0x300] sm:$0xff]
    %v248 = vld [vmem:[%s0 + $0x308] sm:$0xff]
    %v249 = vld [vmem:[%s0 + $0x310] sm:$0xff]
    %v250 = vld [vmem:[%s0 + $0x318] sm:$0xff]
    %v251 = vld [vmem:[%s0 + $0x320] sm:$0xff]
    %v252 = vld [vmem:[%s0 + $0x328] sm:$0xff]
    %v253 = vld [vmem:[%s0 + $0x330] sm:$0xff]
    %v254 = vld [vmem:[%s0 + $0x338] sm:$0xff]
    %v255 = vld [vmem:[%s0 + $0x340] sm:$0xff]
    %v256 = vld [vmem:[%s0 + $0x348] sm:$0xff]
    %v257 = vld [vmem:[%s0 + $0x350] sm:$0xff]
    %v258 = vld [vmem:[%s0 + $0x358] sm:$0xff]
    %v259 = vld [vmem:[%s0 + $0x360] sm:$0xff]
    %v260 = vld [vmem:[%s0 + $0x368] sm:$0xff]
    %v261 = vld [vmem:[%s0 + $0x370] sm:$0xff]
    %v262 = vld [vmem:[%s0 + $0x378] sm:$0xff]
    %v263 = vld [vmem:[%s0 + $0x380] sm:$0xff]
    %v264 = vld [vmem:[%s0 + $0x388] sm:$0xff]
    %v265 = vld [vmem:[%s0 + $0x390] sm:$0xff]
    %v266 = vld [vmem:[%s0 + $0x398] sm:$0xff]
    %v267 = vld [vmem:[%s0 + $0x3a0] sm:$0xff]
    %v268 = vld [vmem:[%s0 + $0x3a8] sm:$0xff]
    %v269 = vld [vmem:[%s0 + $0x3b0] sm:$0xff]
    %v270 = vld [vmem:[%s0 + $0x3b8] sm:$0xff]
    %v271 = vld [vmem:[%s0 + $0x3c0] sm:$0xff]
    %v272 = vld [vmem:[%s0 + $0x3c8] sm:$0xff]
    %v273 = vld [vmem:[%s0 + $0x3d0] sm:$0xff]
    %v274 = vld [vmem:[%s0 + $0x3d8] sm:$0xff]
    %v275 = vld [vmem:[%s0 + $0x3e0] sm:$0xff]
    %v276 = vld [vmem:[%s0 + $0x3e8] sm:$0xff]
    %v277 = vld [vmem:[%s0 + $0x3f0] sm:$0xff]
    %v278 = vld [vmem:[%s0 + $0x3f8] sm:$0xff]
    %v279 = vmul.f32 %v151, 0.0625
    %v280 = vmul.f32 %v152, 0.0625
    %v281 = vmul.f32 %v153, 0.0625
    %v282 = vmul.f32 %v154, 0.0625
    %v283 = vmul.f32 %v155, 0.0625
    %v284 = vmul.f32 %v156, 0.0625
    %v285 = vmul.f32 %v157, 0.0625
    %v286 = vmul.f32 %v158, 0.0625
    %v287 = vmul.f32 %v159, 0.0625
    %v288 = vmul.f32 %v160, 0.0625
    %v289 = vmul.f32 %v161, 0.0625
    %v290 = vmul.f32 %v162, 0.0625
    %v291 = vmul.f32 %v163, 0.0625
    %v292 = vmul.f32 %v164, 0.0625
    %v293 = vmul.f32 %v165, 0.0625
    %v294 = vmul.f32 %v166, 0.0625
    %v295 = vmul.f32 %v167, 0.0625
    %v296 = vmul.f32 %v168, 0.0625
    %v297 = vmul.f32 %v169, 0.0625
    %v298 = vmul.f32 %v170, 0.0625
    %v299 = vmul.f32 %v171, 0.0625
    %v300 = vmul.f32 %v172, 0.0625
    %v301 = vmul.f32 %v173, 0.0625
    %v302 = vmul.f32 %v174, 0.0625
    %v303 = vmul.f32 %v175, 0.0625
    %v304 = vmul.f32 %v176, 0.0625
    %v305 = vmul.f32 %v177, 0.0625
    %v306 = vmul.f32 %v178, 0.0625
    %v307 = vmul.f32 %v179, 0.0625
    %v308 = vmul.f32 %v180, 0.0625
    %v309 = vmul.f32 %v181, 0.0625
    %v310 = vmul.f32 %v182, 0.0625
    %v311 = vmul.f32 %v183, 0.0625
    %v312 = vmul.f32 %v184, 0.0625
    %v313 = vmul.f32 %v185, 0.0625
    %v314 = vmul.f32 %v186, 0.0625
    %v315 = vmul.f32 %v187, 0.0625
    %v316 = vmul.f32 %v188, 0.0625
    %v317 = vmul.f32 %v189, 0.0625
    %v318 = vmul.f32 %v190, 0.0625
    %v319 = vmul.f32 %v191, 0.0625
    %v320 = vmul.f32 %v192, 0.0625
    %v321 = vmul.f32 %v193, 0.0625
    %v322 = vmul.f32 %v194, 0.0625
    %v323 = vmul.f32 %v195, 0.0625
    %v324 = vmul.f32 %v196, 0.0625
    %v325 = vmul.f32 %v197, 0.0625
    %v326 = vmul.f32 %v198, 0.0625
    %v327 = vmul.f32 %v199, 0.0625
    %v328 = vmul.f32 %v200, 0.0625
    %v329 = vmul.f32 %v201, 0.0625
    %v330 = vmul.f32 %v202, 0.0625
    %v331 = vmul.f32 %v203, 0.0625
    %v332 = vmul.f32 %v204, 0.0625
    %v333 = vmul.f32 %v205, 0.0625
    %v334 = vmul.f32 %v206, 0.0625
    %v335 = vmul.f32 %v207, 0.0625
    %v336 = vmul.f32 %v208, 0.0625
    %v337 = vmul.f32 %v209, 0.0625
    %v338 = vmul.f32 %v210, 0.0625
    %v339 = vmul.f32 %v211, 0.0625
    %v340 = vmul.f32 %v212, 0.0625
    %v341 = vmul.f32 %v213, 0.0625
    %v342 = vmul.f32 %v214, 0.0625
    %v343 = vmul.f32 %v215, 0.0625
    %v344 = vmul.f32 %v216, 0.0625
    %v345 = vmul.f32 %v217, 0.0625
    %v346 = vmul.f32 %v218, 0.0625
    %v347 = vmul.f32 %v219, 0.0625
    %v348 = vmul.f32 %v220, 0.0625
    %v349 = vmul.f32 %v221, 0.0625
    %v350 = vmul.f32 %v222, 0.0625
    %v351 = vmul.f32 %v223, 0.0625
    %v352 = vmul.f32 %v224, 0.0625
    %v353 = vmul.f32 %v225, 0.0625
    %v354 = vmul.f32 %v226, 0.0625
    %v355 = vmul.f32 %v227, 0.0625
    %v356 = vmul.f32 %v228, 0.0625
    %v357 = vmul.f32 %v229, 0.0625
    %v358 = vmul.f32 %v230, 0.0625
    %v359 = vmul.f32 %v231, 0.0625
    %v360 = vmul.f32 %v232, 0.0625
    %v361 = vmul.f32 %v233, 0.0625
    %v362 = vmul.f32 %v234, 0.0625
    %v363 = vmul.f32 %v235, 0.0625
    %v364 = vmul.f32 %v236, 0.0625
    %v365 = vmul.f32 %v237, 0.0625
    %v366 = vmul.f32 %v238, 0.0625
    %v367 = vmul.f32 %v239, 0.0625
    %v368 = vmul.f32 %v240, 0.0625
    %v369 = vmul.f32 %v241, 0.0625
    %v370 = vmul.f32 %v242, 0.0625
    %v371 = vmul.f32 %v243, 0.0625
    %v372 = vmul.f32 %v244, 0.0625
    %v373 = vmul.f32 %v245, 0.0625
    %v374 = vmul.f32 %v246, 0.0625
    %v375 = vmul.f32 %v247, 0.0625
    %v376 = vmul.f32 %v248, 0.0625
    %v377 = vmul.f32 %v249, 0.0625
    %v378 = vmul.f32 %v250, 0.0625
    %v379 = vmul.f32 %v251, 0.0625
    %v380 = vmul.f32 %v252, 0.0625
    %v381 = vmul.f32 %v253, 0.0625
    %v382 = vmul.f32 %v254, 0.0625
    %v383 = vmul.f32 %v255, 0.0625
    %v384 = vmul.f32 %v256, 0.0625
    %v385 = vmul.f32 %v257, 0.0625
    %v386 = vmul.f32 %v258, 0.0625
    %v387 = vmul.f32 %v259, 0.0625
    %v388 = vmul.f32 %v260, 0.0625
    %v389 = vmul.f32 %v261, 0.0625
    %v390 = vmul.f32 %v262, 0.0625
    %v391 = vmul.f32 %v263, 0.0625
    %v392 = vmul.f32 %v264, 0.0625
    %v393 = vmul.f32 %v265, 0.0625
    %v394 = vmul.f32 %v266, 0.0625
    %v395 = vmul.f32 %v267, 0.0625
    %v396 = vmul.f32 %v268, 0.0625
    %v397 = vmul.f32 %v269, 0.0625
    %v398 = vmul.f32 %v270, 0.0625
    %v399 = vmul.f32 %v271, 0.0625
    %v400 = vmul.f32 %v272, 0.0625
    %v401 = vmul.f32 %v273, 0.0625
    %v402 = vmul.f32 %v274, 0.0625
    %v403 = vmul.f32 %v275, 0.0625
    %v404 = vmul.f32 %v276, 0.0625
    %v405 = vmul.f32 %v277, 0.0625
    %v406 = vmul.f32 %v278, 0.0625
    %v407 = vld [vmem:[#allocation2] sm:$0xff]
    %v408 = vld [vmem:[#allocation2 + $0x8] sm:$0xff]
    %v409 = vld [vmem:[#allocation2 + $0x10] sm:$0xff]
    %v410 = vld [vmem:[#allocation2 + $0x18] sm:$0xff]
    %v411 = vld [vmem:[#allocation2 + $0x20] sm:$0xff]
    %v412 = vld [vmem:[#allocation2 + $0x28] sm:$0xff]
    %v413 = vld [vmem:[#allocation2 + $0x30] sm:$0xff]
    %v414 = vld [vmem:[#allocation2 + $0x38] sm:$0xff]
    %v415 = vld [vmem:[#allocation2 + $0x40] sm:$0xff]
    %v416 = vld [vmem:[#allocation2 + $0x48] sm:$0xff]
    %v417 = vld [vmem:[#allocation2 + $0x50] sm:$0xff]
    %v418 = vld [vmem:[#allocation2 + $0x58] sm:$0xff]
    %v419 = vld [vmem:[#allocation2 + $0x60] sm:$0xff]
    %v420 = vld [vmem:[#allocation2 + $0x68] sm:$0xff]
    %v421 = vld [vmem:[#allocation2 + $0x70] sm:$0xff]
    %v422 = vld [vmem:[#allocation2 + $0x78] sm:$0xff]
    %v423 = vld [vmem:[#allocation2 + $0x80] sm:$0xff]
    %v424 = vld [vmem:[#allocation2 + $0x88] sm:$0xff]
    %v425 = vld [vmem:[#allocation2 + $0x90] sm:$0xff]
    %v426 = vld [vmem:[#allocation2 + $0x98] sm:$0xff]
    %v427 = vld [vmem:[#allocation2 + $0xa0] sm:$0xff]
    %v428 = vld [vmem:[#allocation2 + $0xa8] sm:$0xff]
    %v429 = vld [vmem:[#allocation2 + $0xb0] sm:$0xff]
    %v430 = vld [vmem:[#allocation2 + $0xb8] sm:$0xff]
    %v431 = vld [vmem:[#allocation2 + $0xc0] sm:$0xff]
    %v432 = vld [vmem:[#allocation2 + $0xc8] sm:$0xff]
    %v433 = vld [vmem:[#allocation2 + $0xd0] sm:$0xff]
    %v434 = vld [vmem:[#allocation2 + $0xd8] sm:$0xff]
    %v435 = vld [vmem:[#allocation2 + $0xe0] sm:$0xff]
    %v436 = vld [vmem:[#allocation2 + $0xe8] sm:$0xff]
    %v437 = vld [vmem:[#allocation2 + $0xf0] sm:$0xff]
    %v438 = vld [vmem:[#allocation2 + $0xf8] sm:$0xff]
    %v439 = vld [vmem:[#allocation2 + $0x100] sm:$0xff]
    %v440 = vld [vmem:[#allocation2 + $0x108] sm:$0xff]
    %v441 = vld [vmem:[#allocation2 + $0x110] sm:$0xff]
    %v442 = vld [vmem:[#allocation2 + $0x118] sm:$0xff]
    %v443 = vld [vmem:[#allocation2 + $0x120] sm:$0xff]
    %v444 = vld [vmem:[#allocation2 + $0x128] sm:$0xff]
    %v445 = vld [vmem:[#allocation2 + $0x130] sm:$0xff]
    %v446 = vld [vmem:[#allocation2 + $0x138] sm:$0xff]
    %v447 = vld [vmem:[#allocation2 + $0x140] sm:$0xff]
    %v448 = vld [vmem:[#allocation2 + $0x148] sm:$0xff]
    %v449 = vld [vmem:[#allocation2 + $0x150] sm:$0xff]
    %v450 = vld [vmem:[#allocation2 + $0x158] sm:$0xff]
    %v451 = vld [vmem:[#allocation2 + $0x160] sm:$0xff]
    %v452 = vld [vmem:[#allocation2 + $0x168] sm:$0xff]
    %v453 = vld [vmem:[#allocation2 + $0x170] sm:$0xff]
    %v454 = vld [vmem:[#allocation2 + $0x178] sm:$0xff]
    %v455 = vld [vmem:[#allocation2 + $0x180] sm:$0xff]
    %v456 = vld [vmem:[#allocation2 + $0x188] sm:$0xff]
    %v457 = vld [vmem:[#allocation2 + $0x190] sm:$0xff]
    %v458 = vld [vmem:[#allocation2 + $0x198] sm:$0xff]
    %v459 = vld [vmem:[#allocation2 + $0x1a0] sm:$0xff]
    %v460 = vld [vmem:[#allocation2 + $0x1a8] sm:$0xff]
    %v461 = vld [vmem:[#allocation2 + $0x1b0] sm:$0xff]
    %v462 = vld [vmem:[#allocation2 + $0x1b8] sm:$0xff]
    %v463 = vld [vmem:[#allocation2 + $0x1c0] sm:$0xff]
    %v464 = vld [vmem:[#allocation2 + $0x1c8] sm:$0xff]
    %v465 = vld [vmem:[#allocation2 + $0x1d0] sm:$0xff]
    %v466 = vld [vmem:[#allocation2 + $0x1d8] sm:$0xff]
    %v467 = vld [vmem:[#allocation2 + $0x1e0] sm:$0xff]
    %v468 = vld [vmem:[#allocation2 + $0x1e8] sm:$0xff]
    %v469 = vld [vmem:[#allocation2 + $0x1f0] sm:$0xff]
    %v470 = vld [vmem:[#allocation2 + $0x1f8] sm:$0xff]
    %v471 = vld [vmem:[#allocation2 + $0x200] sm:$0xff]
    %v472 = vld [vmem:[#allocation2 + $0x208] sm:$0xff]
    %v473 = vld [vmem:[#allocation2 + $0x210] sm:$0xff]
    %v474 = vld [vmem:[#allocation2 + $0x218] sm:$0xff]
    %v475 = vld [vmem:[#allocation2 + $0x220] sm:$0xff]
    %v476 = vld [vmem:[#allocation2 + $0x228] sm:$0xff]
    %v477 = vld [vmem:[#allocation2 + $0x230] sm:$0xff]
    %v478 = vld [vmem:[#allocation2 + $0x238] sm:$0xff]
    %v479 = vld [vmem:[#allocation2 + $0x240] sm:$0xff]
    %v480 = vld [vmem:[#allocation2 + $0x248] sm:$0xff]
    %v481 = vld [vmem:[#allocation2 + $0x250] sm:$0xff]
    %v482 = vld [vmem:[#allocation2 + $0x258] sm:$0xff]
    %v483 = vld [vmem:[#allocation2 + $0x260] sm:$0xff]
    %v484 = vld [vmem:[#allocation2 + $0x268] sm:$0xff]
    %v485 = vld [vmem:[#allocation2 + $0x270] sm:$0xff]
    %v486 = vld [vmem:[#allocation2 + $0x278] sm:$0xff]
    %v487 = vld [vmem:[#allocation2 + $0x280] sm:$0xff]
    %v488 = vld [vmem:[#allocation2 + $0x288] sm:$0xff]
    %v489 = vld [vmem:[#allocation2 + $0x290] sm:$0xff]
    %v490 = vld [vmem:[#allocation2 + $0x298] sm:$0xff]
    %v491 = vld [vmem:[#allocation2 + $0x2a0] sm:$0xff]
    %v492 = vld [vmem:[#allocation2 + $0x2a8] sm:$0xff]
    %v493 = vld [vmem:[#allocation2 + $0x2b0] sm:$0xff]
    %v494 = vld [vmem:[#allocation2 + $0x2b8] sm:$0xff]
    %v495 = vld [vmem:[#allocation2 + $0x2c0] sm:$0xff]
    %v496 = vld [vmem:[#allocation2 + $0x2c8] sm:$0xff]
    %v497 = vld [vmem:[#allocation2 + $0x2d0] sm:$0xff]
    %v498 = vld [vmem:[#allocation2 + $0x2d8] sm:$0xff]
    %v499 = vld [vmem:[#allocation2 + $0x2e0] sm:$0xff]
    %v500 = vld [vmem:[#allocation2 + $0x2e8] sm:$0xff]
    %v501 = vld [vmem:[#allocation2 + $0x2f0] sm:$0xff]
    %v502 = vld [vmem:[#allocation2 + $0x2f8] sm:$0xff]
    %v503 = vld [vmem:[#allocation2 + $0x300] sm:$0xff]
    %v504 = vld [vmem:[#allocation2 + $0x308] sm:$0xff]
    %v505 = vld [vmem:[#allocation2 + $0x310] sm:$0xff]
    %v506 = vld [vmem:[#allocation2 + $0x318] sm:$0xff]
    %v507 = vld [vmem:[#allocation2 + $0x320] sm:$0xff]
    %v508 = vld [vmem:[#allocation2 + $0x328] sm:$0xff]
    %v509 = vld [vmem:[#allocation2 + $0x330] sm:$0xff]
    %v510 = vld [vmem:[#allocation2 + $0x338] sm:$0xff]
    %v511 = vld [vmem:[#allocation2 + $0x340] sm:$0xff]
    %v512 = vld [vmem:[#allocation2 + $0x348] sm:$0xff]
    %v513 = vld [vmem:[#allocation2 + $0x350] sm:$0xff]
    %v514 = vld [vmem:[#allocation2 + $0x358] sm:$0xff]
    %v515 = vld [vmem:[#allocation2 + $0x360] sm:$0xff]
    %v516 = vld [vmem:[#allocation2 + $0x368] sm:$0xff]
    %v517 = vld [vmem:[#allocation2 + $0x370] sm:$0xff]
    %v518 = vld [vmem:[#allocation2 + $0x378] sm:$0xff]
    %v519 = vld [vmem:[#allocation2 + $0x380] sm:$0xff]
    %v520 = vld [vmem:[#allocation2 + $0x388] sm:$0xff]
    %v521 = vld [vmem:[#allocation2 + $0x390] sm:$0xff]
    %v522 = vld [vmem:[#allocation2 + $0x398] sm:$0xff]
    %v523 = vld [vmem:[#allocation2 + $0x3a0] sm:$0xff]
    %v524 = vld [vmem:[#allocation2 + $0x3a8] sm:$0xff]
    %v525 = vld [vmem:[#allocation2 + $0x3b0] sm:$0xff]
    %v526 = vld [vmem:[#allocation2 + $0x3b8] sm:$0xff]
    %v527 = vld [vmem:[#allocation2 + $0x3c0] sm:$0xff]
    %v528 = vld [vmem:[#allocation2 + $0x3c8] sm:$0xff]
    %v529 = vld [vmem:[#allocation2 + $0x3d0] sm:$0xff]
    %v530 = vld [vmem:[#allocation2 + $0x3d8] sm:$0xff]
    %v531 = vld [vmem:[#allocation2 + $0x3e0] sm:$0xff]
    %v532 = vld [vmem:[#allocation2 + $0x3e8] sm:$0xff]
    %v533 = vld [vmem:[#allocation2 + $0x3f0] sm:$0xff]
    %v534 = vld [vmem:[#allocation2 + $0x3f8] sm:$0xff]
    %v535 = vadd.f32 %v407, %v279
    %v536 = vadd.f32 %v408, %v280
    %v537 = vadd.f32 %v409, %v281
    %v538 = vadd.f32 %v410, %v282
    %v539 = vadd.f32 %v411, %v283
    %v540 = vadd.f32 %v412, %v284
    %v541 = vadd.f32 %v413, %v285
    %v542 = vadd.f32 %v414, %v286
    %v543 = vadd.f32 %v415, %v287
    %v544 = vadd.f32 %v416, %v288
    %v545 = vadd.f32 %v417, %v289
    %v546 = vadd.f32 %v418, %v290
    %v547 = vadd.f32 %v419, %v291
    %v548 = vadd.f32 %v420, %v292
    %v549 = vadd.f32 %v421, %v293
    %v550 = vadd.f32 %v422, %v294
    %v551 = vadd.f32 %v423, %v295
    %v552 = vadd.f32 %v424, %v296
    %v553 = vadd.f32 %v425, %v297
    %v554 = vadd.f32 %v426, %v298
    %v555 = vadd.f32 %v427, %v299
    %v556 = vadd.f32 %v428, %v300
    %v557 = vadd.f32 %v429, %v301
    %v558 = vadd.f32 %v430, %v302
    %v559 = vadd.f32 %v431, %v303
    %v560 = vadd.f32 %v432, %v304
    %v561 = vadd.f32 %v433, %v305
    %v562 = vadd.f32 %v434, %v306
    %v563 = vadd.f32 %v435, %v307
    %v564 = vadd.f32 %v436, %v308
    %v565 = vadd.f32 %v437, %v309
    %v566 = vadd.f32 %v438, %v310
    %v567 = vadd.f32 %v439, %v311
    %v568 = vadd.f32 %v440, %v312
    %v569 = vadd.f32 %v441, %v313
    %v570 = vadd.f32 %v442, %v314
    %v571 = vadd.f32 %v443, %v315
    %v572 = vadd.f32 %v444, %v316
    %v573 = vadd.f32 %v445, %v317
    %v574 = vadd.f32 %v446, %v318
    %v575 = vadd.f32 %v447, %v319
    %v576 = vadd.f32 %v448, %v320
    %v577 = vadd.f32 %v449, %v321
    %v578 = vadd.f32 %v450, %v322
    %v579 = vadd.f32 %v451, %v323
    %v580 = vadd.f32 %v452, %v324
    %v581 = vadd.f32 %v453, %v325
    %v582 = vadd.f32 %v454, %v326
    %v583 = vadd.f32 %v455, %v327
    %v584 = vadd.f32 %v456, %v328
    %v585 = vadd.f32 %v457, %v329
    %v586 = vadd.f32 %v458, %v330
    %v587 = vadd.f32 %v459, %v331
    %v588 = vadd.f32 %v460, %v332
    %v589 = vadd.f32 %v461, %v333
    %v590 = vadd.f32 %v462, %v334
    %v591 = vadd.f32 %v463, %v335
    %v592 = vadd.f32 %v464, %v336
    %v593 = vadd.f32 %v465, %v337
    %v594 = vadd.f32 %v466, %v338
    %v595 = vadd.f32 %v467, %v339
    %v596 = vadd.f32 %v468, %v340
    %v597 = vadd.f32 %v469, %v341
    %v598 = vadd.f32 %v470, %v342
    %v599 = vadd.f32 %v471, %v343
    %v600 = vadd.f32 %v472, %v344
    %v601 = vadd.f32 %v473, %v345
    %v602 = vadd.f32 %v474, %v346
    %v603 = vadd.f32 %v475, %v347
    %v604 = vadd.f32 %v476, %v348
    %v605 = vadd.f32 %v477, %v349
    %v606 = vadd.f32 %v478, %v350
    %v607 = vadd.f32 %v479, %v351
    %v608 = vadd.f32 %v480, %v352
    %v609 = vadd.f32 %v481, %v353
    %v610 = vadd.f32 %v482, %v354
    %v611 = vadd.f32 %v483, %v355
    %v612 = vadd.f32 %v484, %v356
    %v613 = vadd.f32 %v485, %v357
    %v614 = vadd.f32 %v486, %v358
    %v615 = vadd.f32 %v487, %v359
    %v616 = vadd.f32 %v488, %v360
    %v617 = vadd.f32 %v489, %v361
    %v618 = vadd.f32 %v490, %v362
    %v619 = vadd.f32 %v491, %v363
    %v620 = vadd.f32 %v492, %v364
    %v621 = vadd.f32 %v493, %v365
    %v622 = vadd.f32 %v494, %v366
    %v623 = vadd.f32 %v495, %v367
    %v624 = vadd.f32 %v496, %v368
    %v625 = vadd.f32 %v497, %v369
    %v626 = vadd.f32 %v498, %v370
    %v627 = vadd.f32 %v499, %v371
    %v628 = vadd.f32 %v500, %v372
    %v629 = vadd.f32 %v501, %v373
    %v630 = vadd.f32 %v502, %v374
    %v631 = vadd.f32 %v503, %v375
    %v632 = vadd.f32 %v504, %v376
    %v633 = vadd.f32 %v505, %v377
    %v634 = vadd.f32 %v506, %v378
    %v635 = vadd.f32 %v507, %v379
    %v636 = vadd.f32 %v508, %v380
    %v637 = vadd.f32 %v509, %v381
    %v638 = vadd.f32 %v510, %v382
    %v639 = vadd.f32 %v511, %v383
    %v640 = vadd.f32 %v512, %v384
    %v641 = vadd.f32 %v513, %v385
    %v642 = vadd.f32 %v514, %v386
    %v643 = vadd.f32 %v515, %v387
    %v644 = vadd.f32 %v516, %v388
    %v645 = vadd.f32 %v517, %v389
    %v646 = vadd.f32 %v518, %v390
    %v647 = vadd.f32 %v519, %v391
    %v648 = vadd.f32 %v520, %v392
    %v649 = vadd.f32 %v521, %v393
    %v650 = vadd.f32 %v522, %v394
    %v651 = vadd.f32 %v523, %v395
    %v652 = vadd.f32 %v524, %v396
    %v653 = vadd.f32 %v525, %v397
    %v654 = vadd.f32 %v526, %v398
    %v655 = vadd.f32 %v527, %v399
    %v656 = vadd.f32 %v528, %v400
    %v657 = vadd.f32 %v529, %v401
    %v658 = vadd.f32 %v530, %v402
    %v659 = vadd.f32 %v531, %v403
    %v660 = vadd.f32 %v532, %v404
    %v661 = vadd.f32 %v533, %v405
    %v662 = vadd.f32 %v534, %v406
    %vm663 = vcmask 130048
    %664 = vst.msk [vmem:[#allocation2] sm:$0xff] %vm663, %v535
    %665 = vst.msk [vmem:[#allocation2 + $0x8] sm:$0xff] %vm663, %v536
    %666 = vst.msk [vmem:[#allocation2 + $0x10] sm:$0xff] %vm663, %v537
    %667 = vst.msk [vmem:[#allocation2 + $0x18] sm:$0xff] %vm663, %v538
    %668 = vst.msk [vmem:[#allocation2 + $0x20] sm:$0xff] %vm663, %v539
    %669 = vst.msk [vmem:[#allocation2 + $0x28] sm:$0xff] %vm663, %v540
    %670 = vst.msk [vmem:[#allocation2 + $0x30] sm:$0xff] %vm663, %v541
    %671 = vst.msk [vmem:[#allocation2 + $0x38] sm:$0xff] %vm663, %v542
    %672 = vst.msk [vmem:[#allocation2 + $0x40] sm:$0xff] %vm663, %v543
    %673 = vst.msk [vmem:[#allocation2 + $0x48] sm:$0xff] %vm663, %v544
    %674 = vst.msk [vmem:[#allocation2 + $0x50] sm:$0xff] %vm663, %v545
    %675 = vst.msk [vmem:[#allocation2 + $0x58] sm:$0xff] %vm663, %v546
    %676 = vst.msk [vmem:[#allocation2 + $0x60] sm:$0xff] %vm663, %v547
    %677 = vst.msk [vmem:[#allocation2 + $0x68] sm:$0xff] %vm663, %v548
    %678 = vst.msk [vmem:[#allocation2 + $0x70] sm:$0xff] %vm663, %v549
    %679 = vst.msk [vmem:[#allocation2 + $0x78] sm:$0xff] %vm663, %v550
    %680 = vst.msk [vmem:[#allocation2 + $0x80] sm:$0xff] %vm663, %v551
    %681 = vst.msk [vmem:[#allocation2 + $0x88] sm:$0xff] %vm663, %v552
    %682 = vst.msk [vmem:[#allocation2 + $0x90] sm:$0xff] %vm663, %v553
    %683 = vst.msk [vmem:[#allocation2 + $0x98] sm:$0xff] %vm663, %v554
    %684 = vst.msk [vmem:[#allocation2 + $0xa0] sm:$0xff] %vm663, %v555
    %685 = vst.msk [vmem:[#allocation2 + $0xa8] sm:$0xff] %vm663, %v556
    %686 = vst.msk [vmem:[#allocation2 + $0xb0] sm:$0xff] %vm663, %v557
    %687 = vst.msk [vmem:[#allocation2 + $0xb8] sm:$0xff] %vm663, %v558
    %688 = vst.msk [vmem:[#allocation2 + $0xc0] sm:$0xff] %vm663, %v559
    %689 = vst.msk [vmem:[#allocation2 + $0xc8] sm:$0xff] %vm663, %v560
    %690 = vst.msk [vmem:[#allocation2 + $0xd0] sm:$0xff] %vm663, %v561
    %691 = vst.msk [vmem:[#allocation2 + $0xd8] sm:$0xff] %vm663, %v562
    %692 = vst.msk [vmem:[#allocation2 + $0xe0] sm:$0xff] %vm663, %v563
    %693 = vst.msk [vmem:[#allocation2 + $0xe8] sm:$0xff] %vm663, %v564
    %694 = vst.msk [vmem:[#allocation2 + $0xf0] sm:$0xff] %vm663, %v565
    %695 = vst.msk [vmem:[#allocation2 + $0xf8] sm:$0xff] %vm663, %v566
    %696 = vst.msk [vmem:[#allocation2 + $0x100] sm:$0xff] %vm663, %v567
    %697 = vst.msk [vmem:[#allocation2 + $0x108] sm:$0xff] %vm663, %v568
    %698 = vst.msk [vmem:[#allocation2 + $0x110] sm:$0xff] %vm663, %v569
    %699 = vst.msk [vmem:[#allocation2 + $0x118] sm:$0xff] %vm663, %v570
    %700 = vst.msk [vmem:[#allocation2 + $0x120] sm:$0xff] %vm663, %v571
    %701 = vst.msk [vmem:[#allocation2 + $0x128] sm:$0xff] %vm663, %v572
    %702 = vst.msk [vmem:[#allocation2 + $0x130] sm:$0xff] %vm663, %v573
    %703 = vst.msk [vmem:[#allocation2 + $0x138] sm:$0xff] %vm663, %v574
    %704 = vst.msk [vmem:[#allocation2 + $0x140] sm:$0xff] %vm663, %v575
    %705 = vst.msk [vmem:[#allocation2 + $0x148] sm:$0xff] %vm663, %v576
    %706 = vst.msk [vmem:[#allocation2 + $0x150] sm:$0xff] %vm663, %v577
    %707 = vst.msk [vmem:[#allocation2 + $0x158] sm:$0xff] %vm663, %v578
    %708 = vst.msk [vmem:[#allocation2 + $0x160] sm:$0xff] %vm663, %v579
    %709 = vst.msk [vmem:[#allocation2 + $0x168] sm:$0xff] %vm663, %v580
    %710 = vst.msk [vmem:[#allocation2 + $0x170] sm:$0xff] %vm663, %v581
    %711 = vst.msk [vmem:[#allocation2 + $0x178] sm:$0xff] %vm663, %v582
    %712 = vst.msk [vmem:[#allocation2 + $0x180] sm:$0xff] %vm663, %v583
    %713 = vst.msk [vmem:[#allocation2 + $0x188] sm:$0xff] %vm663, %v584
    %714 = vst.msk [vmem:[#allocation2 + $0x190] sm:$0xff] %vm663, %v585
    %715 = vst.msk [vmem:[#allocation2 + $0x198] sm:$0xff] %vm663, %v586
    %716 = vst.msk [vmem:[#allocation2 + $0x1a0] sm:$0xff] %vm663, %v587
    %717 = vst.msk [vmem:[#allocation2 + $0x1a8] sm:$0xff] %vm663, %v588
    %718 = vst.msk [vmem:[#allocation2 + $0x1b0] sm:$0xff] %vm663, %v589
    %719 = vst.msk [vmem:[#allocation2 + $0x1b8] sm:$0xff] %vm663, %v590
    %720 = vst.msk [vmem:[#allocation2 + $0x1c0] sm:$0xff] %vm663, %v591
    %721 = vst.msk [vmem:[#allocation2 + $0x1c8] sm:$0xff] %vm663, %v592
    %722 = vst.msk [vmem:[#allocation2 + $0x1d0] sm:$0xff] %vm663, %v593
    %723 = vst.msk [vmem:[#allocation2 + $0x1d8] sm:$0xff] %vm663, %v594
    %724 = vst.msk [vmem:[#allocation2 + $0x1e0] sm:$0xff] %vm663, %v595
    %725 = vst.msk [vmem:[#allocation2 + $0x1e8] sm:$0xff] %vm663, %v596
    %726 = vst.msk [vmem:[#allocation2 + $0x1f0] sm:$0xff] %vm663, %v597
    %727 = vst.msk [vmem:[#allocation2 + $0x1f8] sm:$0xff] %vm663, %v598
    %728 = vst.msk [vmem:[#allocation2 + $0x200] sm:$0xff] %vm663, %v599
    %729 = vst.msk [vmem:[#allocation2 + $0x208] sm:$0xff] %vm663, %v600
    %730 = vst.msk [vmem:[#allocation2 + $0x210] sm:$0xff] %vm663, %v601
    %731 = vst.msk [vmem:[#allocation2 + $0x218] sm:$0xff] %vm663, %v602
    %732 = vst.msk [vmem:[#allocation2 + $0x220] sm:$0xff] %vm663, %v603
    %733 = vst.msk [vmem:[#allocation2 + $0x228] sm:$0xff] %vm663, %v604
    %734 = vst.msk [vmem:[#allocation2 + $0x230] sm:$0xff] %vm663, %v605
    %735 = vst.msk [vmem:[#allocation2 + $0x238] sm:$0xff] %vm663, %v606
    %736 = vst.msk [vmem:[#allocation2 + $0x240] sm:$0xff] %vm663, %v607
    %737 = vst.msk [vmem:[#allocation2 + $0x248] sm:$0xff] %vm663, %v608
    %738 = vst.msk [vmem:[#allocation2 + $0x250] sm:$0xff] %vm663, %v609
    %739 = vst.msk [vmem:[#allocation2 + $0x258] sm:$0xff] %vm663, %v610
    %740 = vst.msk [vmem:[#allocation2 + $0x260] sm:$0xff] %vm663, %v611
    %741 = vst.msk [vmem:[#allocation2 + $0x268] sm:$0xff] %vm663, %v612
    %742 = vst.msk [vmem:[#allocation2 + $0x270] sm:$0xff] %vm663, %v613
    %743 = vst.msk [vmem:[#allocation2 + $0x278] sm:$0xff] %vm663, %v614
    %744 = vst.msk [vmem:[#allocation2 + $0x280] sm:$0xff] %vm663, %v615
    %745 = vst.msk [vmem:[#allocation2 + $0x288] sm:$0xff] %vm663, %v616
    %746 = vst.msk [vmem:[#allocation2 + $0x290] sm:$0xff] %vm663, %v617
    %747 = vst.msk [vmem:[#allocation2 + $0x298] sm:$0xff] %vm663, %v618
    %748 = vst.msk [vmem:[#allocation2 + $0x2a0] sm:$0xff] %vm663, %v619
    %749 = vst.msk [vmem:[#allocation2 + $0x2a8] sm:$0xff] %vm663, %v620
    %750 = vst.msk [vmem:[#allocation2 + $0x2b0] sm:$0xff] %vm663, %v621
    %751 = vst.msk [vmem:[#allocation2 + $0x2b8] sm:$0xff] %vm663, %v622
    %752 = vst.msk [vmem:[#allocation2 + $0x2c0] sm:$0xff] %vm663, %v623
    %753 = vst.msk [vmem:[#allocation2 + $0x2c8] sm:$0xff] %vm663, %v624
    %754 = vst.msk [vmem:[#allocation2 + $0x2d0] sm:$0xff] %vm663, %v625
    %755 = vst.msk [vmem:[#allocation2 + $0x2d8] sm:$0xff] %vm663, %v626
    %756 = vst.msk [vmem:[#allocation2 + $0x2e0] sm:$0xff] %vm663, %v627
    %757 = vst.msk [vmem:[#allocation2 + $0x2e8] sm:$0xff] %vm663, %v628
    %758 = vst.msk [vmem:[#allocation2 + $0x2f0] sm:$0xff] %vm663, %v629
    %759 = vst.msk [vmem:[#allocation2 + $0x2f8] sm:$0xff] %vm663, %v630
    %760 = vst.msk [vmem:[#allocation2 + $0x300] sm:$0xff] %vm663, %v631
    %761 = vst.msk [vmem:[#allocation2 + $0x308] sm:$0xff] %vm663, %v632
    %762 = vst.msk [vmem:[#allocation2 + $0x310] sm:$0xff] %vm663, %v633
    %763 = vst.msk [vmem:[#allocation2 + $0x318] sm:$0xff] %vm663, %v634
    %764 = vst.msk [vmem:[#allocation2 + $0x320] sm:$0xff] %vm663, %v635
    %765 = vst.msk [vmem:[#allocation2 + $0x328] sm:$0xff] %vm663, %v636
    %766 = vst.msk [vmem:[#allocation2 + $0x330] sm:$0xff] %vm663, %v637
    %767 = vst.msk [vmem:[#allocation2 + $0x338] sm:$0xff] %vm663, %v638
    %768 = vst.msk [vmem:[#allocation2 + $0x340] sm:$0xff] %vm663, %v639
    %769 = vst.msk [vmem:[#allocation2 + $0x348] sm:$0xff] %vm663, %v640
    %770 = vst.msk [vmem:[#allocation2 + $0x350] sm:$0xff] %vm663, %v641
    %771 = vst.msk [vmem:[#allocation2 + $0x358] sm:$0xff] %vm663, %v642
    %772 = vst.msk [vmem:[#allocation2 + $0x360] sm:$0xff] %vm663, %v643
    %773 = vst.msk [vmem:[#allocation2 + $0x368] sm:$0xff] %vm663, %v644
    %774 = vst.msk [vmem:[#allocation2 + $0x370] sm:$0xff] %vm663, %v645
    %775 = vst.msk [vmem:[#allocation2 + $0x378] sm:$0xff] %vm663, %v646
    %776 = vst.msk [vmem:[#allocation2 + $0x380] sm:$0xff] %vm663, %v647
    %777 = vst.msk [vmem:[#allocation2 + $0x388] sm:$0xff] %vm663, %v648
    %778 = vst.msk [vmem:[#allocation2 + $0x390] sm:$0xff] %vm663, %v649
    %779 = vst.msk [vmem:[#allocation2 + $0x398] sm:$0xff] %vm663, %v650
    %780 = vst.msk [vmem:[#allocation2 + $0x3a0] sm:$0xff] %vm663, %v651
    %781 = vst.msk [vmem:[#allocation2 + $0x3a8] sm:$0xff] %vm663, %v652
    %782 = vst.msk [vmem:[#allocation2 + $0x3b0] sm:$0xff] %vm663, %v653
    %783 = vst.msk [vmem:[#allocation2 + $0x3b8] sm:$0xff] %vm663, %v654
    %784 = vst.msk [vmem:[#allocation2 + $0x3c0] sm:$0xff] %vm663, %v655
    %785 = vst.msk [vmem:[#allocation2 + $0x3c8] sm:$0xff] %vm663, %v656
    %786 = vst.msk [vmem:[#allocation2 + $0x3d0] sm:$0xff] %vm663, %v657
    %787 = vst.msk [vmem:[#allocation2 + $0x3d8] sm:$0xff] %vm663, %v658
    %788 = vst.msk [vmem:[#allocation2 + $0x3e0] sm:$0xff] %vm663, %v659
    %789 = vst.msk [vmem:[#allocation2 + $0x3e8] sm:$0xff] %vm663, %v660
    %790 = vst.msk [vmem:[#allocation2 + $0x3f0] sm:$0xff] %vm663, %v661
    %791 = vst.msk [vmem:[#allocation2 + $0x3f8] sm:$0xff] %vm663, %v662
    // Predicated region
    $region18: #{tpu_custom_call.1} parent=1 // pred_check
      %p792 = pneg %p18
    $region19: #{tpu_custom_call.1} parent=1 // pred_check_branch
      %794 = sbr.rel (%p792) target = $region21
    $region20: #{tpu_custom_call.1} parent=1 // pred_region
      %v795 = vld [vmem:[#allocation2] sm:$0xff]
      %v796 = vld [vmem:[#allocation2 + $0x8] sm:$0xff]
      %v797 = vld [vmem:[#allocation2 + $0x10] sm:$0xff]
      %v798 = vld [vmem:[#allocation2 + $0x18] sm:$0xff]
      %v799 = vld [vmem:[#allocation2 + $0x20] sm:$0xff]
      %v800 = vld [vmem:[#allocation2 + $0x28] sm:$0xff]
      %v801 = vld [vmem:[#allocation2 + $0x30] sm:$0xff]
      %v802 = vld [vmem:[#allocation2 + $0x38] sm:$0xff]
      %v803 = vld [vmem:[#allocation2 + $0x40] sm:$0xff]
      %v804 = vld [vmem:[#allocation2 + $0x48] sm:$0xff]
      %v805 = vld [vmem:[#allocation2 + $0x50] sm:$0xff]
      %v806 = vld [vmem:[#allocation2 + $0x58] sm:$0xff]
      %v807 = vld [vmem:[#allocation2 + $0x60] sm:$0xff]
      %v808 = vld [vmem:[#allocation2 + $0x68] sm:$0xff]
      %v809 = vld [vmem:[#allocation2 + $0x70] sm:$0xff]
      %v810 = vld [vmem:[#allocation2 + $0x78] sm:$0xff]
      %v811 = vld [vmem:[#allocation2 + $0x80] sm:$0xff]
      %v812 = vld [vmem:[#allocation2 + $0x88] sm:$0xff]
      %v813 = vld [vmem:[#allocation2 + $0x90] sm:$0xff]
      %v814 = vld [vmem:[#allocation2 + $0x98] sm:$0xff]
      %v815 = vld [vmem:[#allocation2 + $0xa0] sm:$0xff]
      %v816 = vld [vmem:[#allocation2 + $0xa8] sm:$0xff]
      %v817 = vld [vmem:[#allocation2 + $0xb0] sm:$0xff]
      %v818 = vld [vmem:[#allocation2 + $0xb8] sm:$0xff]
      %v819 = vld [vmem:[#allocation2 + $0xc0] sm:$0xff]
      %v820 = vld [vmem:[#allocation2 + $0xc8] sm:$0xff]
      %v821 = vld [vmem:[#allocation2 + $0xd0] sm:$0xff]
      %v822 = vld [vmem:[#allocation2 + $0xd8] sm:$0xff]
      %v823 = vld [vmem:[#allocation2 + $0xe0] sm:$0xff]
      %v824 = vld [vmem:[#allocation2 + $0xe8] sm:$0xff]
      %v825 = vld [vmem:[#allocation2 + $0xf0] sm:$0xff]
      %v826 = vld [vmem:[#allocation2 + $0xf8] sm:$0xff]
      %v827 = vld [vmem:[#allocation2 + $0x100] sm:$0xff]
      %v828 = vld [vmem:[#allocation2 + $0x108] sm:$0xff]
      %v829 = vld [vmem:[#allocation2 + $0x110] sm:$0xff]
      %v830 = vld [vmem:[#allocation2 + $0x118] sm:$0xff]
      %v831 = vld [vmem:[#allocation2 + $0x120] sm:$0xff]
      %v832 = vld [vmem:[#allocation2 + $0x128] sm:$0xff]
      %v833 = vld [vmem:[#allocation2 + $0x130] sm:$0xff]
      %v834 = vld [vmem:[#allocation2 + $0x138] sm:$0xff]
      %v835 = vld [vmem:[#allocation2 + $0x140] sm:$0xff]
      %v836 = vld [vmem:[#allocation2 + $0x148] sm:$0xff]
      %v837 = vld [vmem:[#allocation2 + $0x150] sm:$0xff]
      %v838 = vld [vmem:[#allocation2 + $0x158] sm:$0xff]
      %v839 = vld [vmem:[#allocation2 + $0x160] sm:$0xff]
      %v840 = vld [vmem:[#allocation2 + $0x168] sm:$0xff]
      %v841 = vld [vmem:[#allocation2 + $0x170] sm:$0xff]
      %v842 = vld [vmem:[#allocation2 + $0x178] sm:$0xff]
      %v843 = vld [vmem:[#allocation2 + $0x180] sm:$0xff]
      %v844 = vld [vmem:[#allocation2 + $0x188] sm:$0xff]
      %v845 = vld [vmem:[#allocation2 + $0x190] sm:$0xff]
      %v846 = vld [vmem:[#allocation2 + $0x198] sm:$0xff]
      %v847 = vld [vmem:[#allocation2 + $0x1a0] sm:$0xff]
      %v848 = vld [vmem:[#allocation2 + $0x1a8] sm:$0xff]
      %v849 = vld [vmem:[#allocation2 + $0x1b0] sm:$0xff]
      %v850 = vld [vmem:[#allocation2 + $0x1b8] sm:$0xff]
      %v851 = vld [vmem:[#allocation2 + $0x1c0] sm:$0xff]
      %v852 = vld [vmem:[#allocation2 + $0x1c8] sm:$0xff]
      %v853 = vld [vmem:[#allocation2 + $0x1d0] sm:$0xff]
      %v854 = vld [vmem:[#allocation2 + $0x1d8] sm:$0xff]
      %v855 = vld [vmem:[#allocation2 + $0x1e0] sm:$0xff]
      %v856 = vld [vmem:[#allocation2 + $0x1e8] sm:$0xff]
      %v857 = vld [vmem:[#allocation2 + $0x1f0] sm:$0xff]
      %v858 = vld [vmem:[#allocation2 + $0x1f8] sm:$0xff]
      %v859 = vld [vmem:[#allocation2 + $0x200] sm:$0xff]
      %v860 = vld [vmem:[#allocation2 + $0x208] sm:$0xff]
      %v861 = vld [vmem:[#allocation2 + $0x210] sm:$0xff]
      %v862 = vld [vmem:[#allocation2 + $0x218] sm:$0xff]
      %v863 = vld [vmem:[#allocation2 + $0x220] sm:$0xff]
      %v864 = vld [vmem:[#allocation2 + $0x228] sm:$0xff]
      %v865 = vld [vmem:[#allocation2 + $0x230] sm:$0xff]
      %v866 = vld [vmem:[#allocation2 + $0x238] sm:$0xff]
      %v867 = vld [vmem:[#allocation2 + $0x240] sm:$0xff]
      %v868 = vld [vmem:[#allocation2 + $0x248] sm:$0xff]
      %v869 = vld [vmem:[#allocation2 + $0x250] sm:$0xff]
      %v870 = vld [vmem:[#allocation2 + $0x258] sm:$0xff]
      %v871 = vld [vmem:[#allocation2 + $0x260] sm:$0xff]
      %v872 = vld [vmem:[#allocation2 + $0x268] sm:$0xff]
      %v873 = vld [vmem:[#allocation2 + $0x270] sm:$0xff]
      %v874 = vld [vmem:[#allocation2 + $0x278] sm:$0xff]
      %v875 = vld [vmem:[#allocation2 + $0x280] sm:$0xff]
      %v876 = vld [vmem:[#allocation2 + $0x288] sm:$0xff]
      %v877 = vld [vmem:[#allocation2 + $0x290] sm:$0xff]
      %v878 = vld [vmem:[#allocation2 + $0x298] sm:$0xff]
      %v879 = vld [vmem:[#allocation2 + $0x2a0] sm:$0xff]
      %v880 = vld [vmem:[#allocation2 + $0x2a8] sm:$0xff]
      %v881 = vld [vmem:[#allocation2 + $0x2b0] sm:$0xff]
      %v882 = vld [vmem:[#allocation2 + $0x2b8] sm:$0xff]
      %v883 = vld [vmem:[#allocation2 + $0x2c0] sm:$0xff]
      %v884 = vld [vmem:[#allocation2 + $0x2c8] sm:$0xff]
      %v885 = vld [vmem:[#allocation2 + $0x2d0] sm:$0xff]
      %v886 = vld [vmem:[#allocation2 + $0x2d8] sm:$0xff]
      %v887 = vld [vmem:[#allocation2 + $0x2e0] sm:$0xff]
      %v888 = vld [vmem:[#allocation2 + $0x2e8] sm:$0xff]
      %v889 = vld [vmem:[#allocation2 + $0x2f0] sm:$0xff]
      %v890 = vld [vmem:[#allocation2 + $0x2f8] sm:$0xff]
      %v891 = vld [vmem:[#allocation2 + $0x300] sm:$0xff]
      %v892 = vld [vmem:[#allocation2 + $0x308] sm:$0xff]
      %v893 = vld [vmem:[#allocation2 + $0x310] sm:$0xff]
      %v894 = vld [vmem:[#allocation2 + $0x318] sm:$0xff]
      %v895 = vld [vmem:[#allocation2 + $0x320] sm:$0xff]
      %v896 = vld [vmem:[#allocation2 + $0x328] sm:$0xff]
      %v897 = vld [vmem:[#allocation2 + $0x330] sm:$0xff]
      %v898 = vld [vmem:[#allocation2 + $0x338] sm:$0xff]
      %v899 = vld [vmem:[#allocation2 + $0x340] sm:$0xff]
      %v900 = vld [vmem:[#allocation2 + $0x348] sm:$0xff]
      %v901 = vld [vmem:[#allocation2 + $0x350] sm:$0xff]
      %v902 = vld [vmem:[#allocation2 + $0x358] sm:$0xff]
      %v903 = vld [vmem:[#allocation2 + $0x360] sm:$0xff]
      %v904 = vld [vmem:[#allocation2 + $0x368] sm:$0xff]
      %v905 = vld [vmem:[#allocation2 + $0x370] sm:$0xff]
      %v906 = vld [vmem:[#allocation2 + $0x378] sm:$0xff]
      %v907 = vld [vmem:[#allocation2 + $0x380] sm:$0xff]
      %v908 = vld [vmem:[#allocation2 + $0x388] sm:$0xff]
      %v909 = vld [vmem:[#allocation2 + $0x390] sm:$0xff]
      %v910 = vld [vmem:[#allocation2 + $0x398] sm:$0xff]
      %v911 = vld [vmem:[#allocation2 + $0x3a0] sm:$0xff]
      %v912 = vld [vmem:[#allocation2 + $0x3a8] sm:$0xff]
      %v913 = vld [vmem:[#allocation2 + $0x3b0] sm:$0xff]
      %v914 = vld [vmem:[#allocation2 + $0x3b8] sm:$0xff]
      %v915 = vld [vmem:[#allocation2 + $0x3c0] sm:$0xff]
      %v916 = vld [vmem:[#allocation2 + $0x3c8] sm:$0xff]
      %v917 = vld [vmem:[#allocation2 + $0x3d0] sm:$0xff]
      %v918 = vld [vmem:[#allocation2 + $0x3d8] sm:$0xff]
      %v919 = vld [vmem:[#allocation2 + $0x3e0] sm:$0xff]
      %v920 = vld [vmem:[#allocation2 + $0x3e8] sm:$0xff]
      %v921 = vld [vmem:[#allocation2 + $0x3f0] sm:$0xff]
      %v922 = vld [vmem:[#allocation2 + $0x3f8] sm:$0xff]
      %v923 = vsel %vm663, %v795, 0.0
      %924 = vadd.xlane.f32.xlu0 %v923
      %v925 = vpop.xlane.xlu0 %924
      %v926 = vsel %vm663, %v796, 0.0
      %927 = vadd.xlane.f32.xlu0 %v926
      %v928 = vpop.xlane.xlu0 %927
      %v929 = vsel %vm663, %v797, 0.0
      %930 = vadd.xlane.f32.xlu0 %v929
      %v931 = vpop.xlane.xlu0 %930
      %v932 = vsel %vm663, %v798, 0.0
      %933 = vadd.xlane.f32.xlu0 %v932
      %v934 = vpop.xlane.xlu0 %933
      %v935 = vsel %vm663, %v799, 0.0
      %936 = vadd.xlane.f32.xlu0 %v935
      %v937 = vpop.xlane.xlu0 %936
      %v938 = vsel %vm663, %v800, 0.0
      %939 = vadd.xlane.f32.xlu0 %v938
      %v940 = vpop.xlane.xlu0 %939
      %v941 = vsel %vm663, %v801, 0.0
      %942 = vadd.xlane.f32.xlu0 %v941
      %v943 = vpop.xlane.xlu0 %942
      %v944 = vsel %vm663, %v802, 0.0
      %945 = vadd.xlane.f32.xlu0 %v944
      %v946 = vpop.xlane.xlu0 %945
      %v947 = vsel %vm663, %v803, 0.0
      %948 = vadd.xlane.f32.xlu0 %v947
      %v949 = vpop.xlane.xlu0 %948
      %v950 = vsel %vm663, %v804, 0.0
      %951 = vadd.xlane.f32.xlu0 %v950
      %v952 = vpop.xlane.xlu0 %951
      %v953 = vsel %vm663, %v805, 0.0
      %954 = vadd.xlane.f32.xlu0 %v953
      %v955 = vpop.xlane.xlu0 %954
      %v956 = vsel %vm663, %v806, 0.0
      %957 = vadd.xlane.f32.xlu0 %v956
      %v958 = vpop.xlane.xlu0 %957
      %v959 = vsel %vm663, %v807, 0.0
      %960 = vadd.xlane.f32.xlu0 %v959
      %v961 = vpop.xlane.xlu0 %960
      %v962 = vsel %vm663, %v808, 0.0
      %963 = vadd.xlane.f32.xlu0 %v962
      %v964 = vpop.xlane.xlu0 %963
      %v965 = vsel %vm663, %v809, 0.0
      %966 = vadd.xlane.f32.xlu0 %v965
      %v967 = vpop.xlane.xlu0 %966
      %v968 = vsel %vm663, %v810, 0.0
      %969 = vadd.xlane.f32.xlu0 %v968
      %v970 = vpop.xlane.xlu0 %969
      %v971 = vsel %vm663, %v811, 0.0
      %972 = vadd.xlane.f32.xlu0 %v971
      %v973 = vpop.xlane.xlu0 %972
      %v974 = vsel %vm663, %v812, 0.0
      %975 = vadd.xlane.f32.xlu0 %v974
      %v976 = vpop.xlane.xlu0 %975
      %v977 = vsel %vm663, %v813, 0.0
      %978 = vadd.xlane.f32.xlu0 %v977
      %v979 = vpop.xlane.xlu0 %978
      %v980 = vsel %vm663, %v814, 0.0
      %981 = vadd.xlane.f32.xlu0 %v980
      %v982 = vpop.xlane.xlu0 %981
      %v983 = vsel %vm663, %v815, 0.0
      %984 = vadd.xlane.f32.xlu0 %v983
      %v985 = vpop.xlane.xlu0 %984
      %v986 = vsel %vm663, %v816, 0.0
      %987 = vadd.xlane.f32.xlu0 %v986
      %v988 = vpop.xlane.xlu0 %987
      %v989 = vsel %vm663, %v817, 0.0
      %990 = vadd.xlane.f32.xlu0 %v989
      %v991 = vpop.xlane.xlu0 %990
      %v992 = vsel %vm663, %v818, 0.0
      %993 = vadd.xlane.f32.xlu0 %v992
      %v994 = vpop.xlane.xlu0 %993
      %v995 = vsel %vm663, %v819, 0.0
      %996 = vadd.xlane.f32.xlu0 %v995
      %v997 = vpop.xlane.xlu0 %996
      %v998 = vsel %vm663, %v820, 0.0
      %999 = vadd.xlane.f32.xlu0 %v998
      %v1000 = vpop.xlane.xlu0 %999
      %v1001 = vsel %vm663, %v821, 0.0
      %1002 = vadd.xlane.f32.xlu0 %v1001
      %v1003 = vpop.xlane.xlu0 %1002
      %v1004 = vsel %vm663, %v822, 0.0
      %1005 = vadd.xlane.f32.xlu0 %v1004
      %v1006 = vpop.xlane.xlu0 %1005
      %v1007 = vsel %vm663, %v823, 0.0
      %1008 = vadd.xlane.f32.xlu0 %v1007
      %v1009 = vpop.xlane.xlu0 %1008
      %v1010 = vsel %vm663, %v824, 0.0
      %1011 = vadd.xlane.f32.xlu0 %v1010
      %v1012 = vpop.xlane.xlu0 %1011
      %v1013 = vsel %vm663, %v825, 0.0
      %1014 = vadd.xlane.f32.xlu0 %v1013
      %v1015 = vpop.xlane.xlu0 %1014
      %v1016 = vsel %vm663, %v826, 0.0
      %1017 = vadd.xlane.f32.xlu0 %v1016
      %v1018 = vpop.xlane.xlu0 %1017
      %v1019 = vsel %vm663, %v827, 0.0
      %1020 = vadd.xlane.f32.xlu0 %v1019
      %v1021 = vpop.xlane.xlu0 %1020
      %v1022 = vsel %vm663, %v828, 0.0
      %1023 = vadd.xlane.f32.xlu0 %v1022
      %v1024 = vpop.xlane.xlu0 %1023
      %v1025 = vsel %vm663, %v829, 0.0
      %1026 = vadd.xlane.f32.xlu0 %v1025
      %v1027 = vpop.xlane.xlu0 %1026
      %v1028 = vsel %vm663, %v830, 0.0
      %1029 = vadd.xlane.f32.xlu0 %v1028
      %v1030 = vpop.xlane.xlu0 %1029
      %v1031 = vsel %vm663, %v831, 0.0
      %1032 = vadd.xlane.f32.xlu0 %v1031
      %v1033 = vpop.xlane.xlu0 %1032
      %v1034 = vsel %vm663, %v832, 0.0
      %1035 = vadd.xlane.f32.xlu0 %v1034
      %v1036 = vpop.xlane.xlu0 %1035
      %v1037 = vsel %vm663, %v833, 0.0
      %1038 = vadd.xlane.f32.xlu0 %v1037
      %v1039 = vpop.xlane.xlu0 %1038
      %v1040 = vsel %vm663, %v834, 0.0
      %1041 = vadd.xlane.f32.xlu0 %v1040
      %v1042 = vpop.xlane.xlu0 %1041
      %v1043 = vsel %vm663, %v835, 0.0
      %1044 = vadd.xlane.f32.xlu0 %v1043
      %v1045 = vpop.xlane.xlu0 %1044
      %v1046 = vsel %vm663, %v836, 0.0
      %1047 = vadd.xlane.f32.xlu0 %v1046
      %v1048 = vpop.xlane.xlu0 %1047
      %v1049 = vsel %vm663, %v837, 0.0
      %1050 = vadd.xlane.f32.xlu0 %v1049
      %v1051 = vpop.xlane.xlu0 %1050
      %v1052 = vsel %vm663, %v838, 0.0
      %1053 = vadd.xlane.f32.xlu0 %v1052
      %v1054 = vpop.xlane.xlu0 %1053
      %v1055 = vsel %vm663, %v839, 0.0
      %1056 = vadd.xlane.f32.xlu0 %v1055
      %v1057 = vpop.xlane.xlu0 %1056
      %v1058 = vsel %vm663, %v840, 0.0
      %1059 = vadd.xlane.f32.xlu0 %v1058
      %v1060 = vpop.xlane.xlu0 %1059
      %v1061 = vsel %vm663, %v841, 0.0
      %1062 = vadd.xlane.f32.xlu0 %v1061
      %v1063 = vpop.xlane.xlu0 %1062
      %v1064 = vsel %vm663, %v842, 0.0
      %1065 = vadd.xlane.f32.xlu0 %v1064
      %v1066 = vpop.xlane.xlu0 %1065
      %v1067 = vsel %vm663, %v843, 0.0
      %1068 = vadd.xlane.f32.xlu0 %v1067
      %v1069 = vpop.xlane.xlu0 %1068
      %v1070 = vsel %vm663, %v844, 0.0
      %1071 = vadd.xlane.f32.xlu0 %v1070
      %v1072 = vpop.xlane.xlu0 %1071
      %v1073 = vsel %vm663, %v845, 0.0
      %1074 = vadd.xlane.f32.xlu0 %v1073
      %v1075 = vpop.xlane.xlu0 %1074
      %v1076 = vsel %vm663, %v846, 0.0
      %1077 = vadd.xlane.f32.xlu0 %v1076
      %v1078 = vpop.xlane.xlu0 %1077
      %v1079 = vsel %vm663, %v847, 0.0
      %1080 = vadd.xlane.f32.xlu0 %v1079
      %v1081 = vpop.xlane.xlu0 %1080
      %v1082 = vsel %vm663, %v848, 0.0
      %1083 = vadd.xlane.f32.xlu0 %v1082
      %v1084 = vpop.xlane.xlu0 %1083
      %v1085 = vsel %vm663, %v849, 0.0
      %1086 = vadd.xlane.f32.xlu0 %v1085
      %v1087 = vpop.xlane.xlu0 %1086
      %v1088 = vsel %vm663, %v850, 0.0
      %1089 = vadd.xlane.f32.xlu0 %v1088
      %v1090 = vpop.xlane.xlu0 %1089
      %v1091 = vsel %vm663, %v851, 0.0
      %1092 = vadd.xlane.f32.xlu0 %v1091
      %v1093 = vpop.xlane.xlu0 %1092
      %v1094 = vsel %vm663, %v852, 0.0
      %1095 = vadd.xlane.f32.xlu0 %v1094
      %v1096 = vpop.xlane.xlu0 %1095
      %v1097 = vsel %vm663, %v853, 0.0
      %1098 = vadd.xlane.f32.xlu0 %v1097
      %v1099 = vpop.xlane.xlu0 %1098
      %v1100 = vsel %vm663, %v854, 0.0
      %1101 = vadd.xlane.f32.xlu0 %v1100
      %v1102 = vpop.xlane.xlu0 %1101
      %v1103 = vsel %vm663, %v855, 0.0
      %1104 = vadd.xlane.f32.xlu0 %v1103
      %v1105 = vpop.xlane.xlu0 %1104
      %v1106 = vsel %vm663, %v856, 0.0
      %1107 = vadd.xlane.f32.xlu0 %v1106
      %v1108 = vpop.xlane.xlu0 %1107
      %v1109 = vsel %vm663, %v857, 0.0
      %1110 = vadd.xlane.f32.xlu0 %v1109
      %v1111 = vpop.xlane.xlu0 %1110
      %v1112 = vsel %vm663, %v858, 0.0
      %1113 = vadd.xlane.f32.xlu0 %v1112
      %v1114 = vpop.xlane.xlu0 %1113
      %v1115 = vsel %vm663, %v859, 0.0
      %1116 = vadd.xlane.f32.xlu0 %v1115
      %v1117 = vpop.xlane.xlu0 %1116
      %v1118 = vsel %vm663, %v860, 0.0
      %1119 = vadd.xlane.f32.xlu0 %v1118
      %v1120 = vpop.xlane.xlu0 %1119
      %v1121 = vsel %vm663, %v861, 0.0
      %1122 = vadd.xlane.f32.xlu0 %v1121
      %v1123 = vpop.xlane.xlu0 %1122
      %v1124 = vsel %vm663, %v862, 0.0
      %1125 = vadd.xlane.f32.xlu0 %v1124
      %v1126 = vpop.xlane.xlu0 %1125
      %v1127 = vsel %vm663, %v863, 0.0
      %1128 = vadd.xlane.f32.xlu0 %v1127
      %v1129 = vpop.xlane.xlu0 %1128
      %v1130 = vsel %vm663, %v864, 0.0
      %1131 = vadd.xlane.f32.xlu0 %v1130
      %v1132 = vpop.xlane.xlu0 %1131
      %v1133 = vsel %vm663, %v865, 0.0
      %1134 = vadd.xlane.f32.xlu0 %v1133
      %v1135 = vpop.xlane.xlu0 %1134
      %v1136 = vsel %vm663, %v866, 0.0
      %1137 = vadd.xlane.f32.xlu0 %v1136
      %v1138 = vpop.xlane.xlu0 %1137
      %v1139 = vsel %vm663, %v867, 0.0
      %1140 = vadd.xlane.f32.xlu0 %v1139
      %v1141 = vpop.xlane.xlu0 %1140
      %v1142 = vsel %vm663, %v868, 0.0
      %1143 = vadd.xlane.f32.xlu0 %v1142
      %v1144 = vpop.xlane.xlu0 %1143
      %v1145 = vsel %vm663, %v869, 0.0
      %1146 = vadd.xlane.f32.xlu0 %v1145
      %v1147 = vpop.xlane.xlu0 %1146
      %v1148 = vsel %vm663, %v870, 0.0
      %1149 = vadd.xlane.f32.xlu0 %v1148
      %v1150 = vpop.xlane.xlu0 %1149
      %v1151 = vsel %vm663, %v871, 0.0
      %1152 = vadd.xlane.f32.xlu0 %v1151
      %v1153 = vpop.xlane.xlu0 %1152
      %v1154 = vsel %vm663, %v872, 0.0
      %1155 = vadd.xlane.f32.xlu0 %v1154
      %v1156 = vpop.xlane.xlu0 %1155
      %v1157 = vsel %vm663, %v873, 0.0
      %1158 = vadd.xlane.f32.xlu0 %v1157
      %v1159 = vpop.xlane.xlu0 %1158
      %v1160 = vsel %vm663, %v874, 0.0
      %1161 = vadd.xlane.f32.xlu0 %v1160
      %v1162 = vpop.xlane.xlu0 %1161
      %v1163 = vsel %vm663, %v875, 0.0
      %1164 = vadd.xlane.f32.xlu0 %v1163
      %v1165 = vpop.xlane.xlu0 %1164
      %v1166 = vsel %vm663, %v876, 0.0
      %1167 = vadd.xlane.f32.xlu0 %v1166
      %v1168 = vpop.xlane.xlu0 %1167
      %v1169 = vsel %vm663, %v877, 0.0
      %1170 = vadd.xlane.f32.xlu0 %v1169
      %v1171 = vpop.xlane.xlu0 %1170
      %v1172 = vsel %vm663, %v878, 0.0
      %1173 = vadd.xlane.f32.xlu0 %v1172
      %v1174 = vpop.xlane.xlu0 %1173
      %v1175 = vsel %vm663, %v879, 0.0
      %1176 = vadd.xlane.f32.xlu0 %v1175
      %v1177 = vpop.xlane.xlu0 %1176
      %v1178 = vsel %vm663, %v880, 0.0
      %1179 = vadd.xlane.f32.xlu0 %v1178
      %v1180 = vpop.xlane.xlu0 %1179
      %v1181 = vsel %vm663, %v881, 0.0
      %1182 = vadd.xlane.f32.xlu0 %v1181
      %v1183 = vpop.xlane.xlu0 %1182
      %v1184 = vsel %vm663, %v882, 0.0
      %1185 = vadd.xlane.f32.xlu0 %v1184
      %v1186 = vpop.xlane.xlu0 %1185
      %v1187 = vsel %vm663, %v883, 0.0
      %1188 = vadd.xlane.f32.xlu0 %v1187
      %v1189 = vpop.xlane.xlu0 %1188
      %v1190 = vsel %vm663, %v884, 0.0
      %1191 = vadd.xlane.f32.xlu0 %v1190
      %v1192 = vpop.xlane.xlu0 %1191
      %v1193 = vsel %vm663, %v885, 0.0
      %1194 = vadd.xlane.f32.xlu0 %v1193
      %v1195 = vpop.xlane.xlu0 %1194
      %v1196 = vsel %vm663, %v886, 0.0
      %1197 = vadd.xlane.f32.xlu0 %v1196
      %v1198 = vpop.xlane.xlu0 %1197
      %v1199 = vsel %vm663, %v887, 0.0
      %1200 = vadd.xlane.f32.xlu0 %v1199
      %v1201 = vpop.xlane.xlu0 %1200
      %v1202 = vsel %vm663, %v888, 0.0
      %1203 = vadd.xlane.f32.xlu0 %v1202
      %v1204 = vpop.xlane.xlu0 %1203
      %v1205 = vsel %vm663, %v889, 0.0
      %1206 = vadd.xlane.f32.xlu0 %v1205
      %v1207 = vpop.xlane.xlu0 %1206
      %v1208 = vsel %vm663, %v890, 0.0
      %1209 = vadd.xlane.f32.xlu0 %v1208
      %v1210 = vpop.xlane.xlu0 %1209
      %v1211 = vsel %vm663, %v891, 0.0
      %1212 = vadd.xlane.f32.xlu0 %v1211
      %v1213 = vpop.xlane.xlu0 %1212
      %v1214 = vsel %vm663, %v892, 0.0
      %1215 = vadd.xlane.f32.xlu0 %v1214
      %v1216 = vpop.xlane.xlu0 %1215
      %v1217 = vsel %vm663, %v893, 0.0
      %1218 = vadd.xlane.f32.xlu0 %v1217
      %v1219 = vpop.xlane.xlu0 %1218
      %v1220 = vsel %vm663, %v894, 0.0
      %1221 = vadd.xlane.f32.xlu0 %v1220
      %v1222 = vpop.xlane.xlu0 %1221
      %v1223 = vsel %vm663, %v895, 0.0
      %1224 = vadd.xlane.f32.xlu0 %v1223
      %v1225 = vpop.xlane.xlu0 %1224
      %v1226 = vsel %vm663, %v896, 0.0
      %1227 = vadd.xlane.f32.xlu0 %v1226
      %v1228 = vpop.xlane.xlu0 %1227
      %v1229 = vsel %vm663, %v897, 0.0
      %1230 = vadd.xlane.f32.xlu0 %v1229
      %v1231 = vpop.xlane.xlu0 %1230
      %v1232 = vsel %vm663, %v898, 0.0
      %1233 = vadd.xlane.f32.xlu0 %v1232
      %v1234 = vpop.xlane.xlu0 %1233
      %v1235 = vsel %vm663, %v899, 0.0
      %1236 = vadd.xlane.f32.xlu0 %v1235
      %v1237 = vpop.xlane.xlu0 %1236
      %v1238 = vsel %vm663, %v900, 0.0
      %1239 = vadd.xlane.f32.xlu0 %v1238
      %v1240 = vpop.xlane.xlu0 %1239
      %v1241 = vsel %vm663, %v901, 0.0
      %1242 = vadd.xlane.f32.xlu0 %v1241
      %v1243 = vpop.xlane.xlu0 %1242
      %v1244 = vsel %vm663, %v902, 0.0
      %1245 = vadd.xlane.f32.xlu0 %v1244
      %v1246 = vpop.xlane.xlu0 %1245
      %v1247 = vsel %vm663, %v903, 0.0
      %1248 = vadd.xlane.f32.xlu0 %v1247
      %v1249 = vpop.xlane.xlu0 %1248
      %v1250 = vsel %vm663, %v904, 0.0
      %1251 = vadd.xlane.f32.xlu0 %v1250
      %v1252 = vpop.xlane.xlu0 %1251
      %v1253 = vsel %vm663, %v905, 0.0
      %1254 = vadd.xlane.f32.xlu0 %v1253
      %v1255 = vpop.xlane.xlu0 %1254
      %v1256 = vsel %vm663, %v906, 0.0
      %1257 = vadd.xlane.f32.xlu0 %v1256
      %v1258 = vpop.xlane.xlu0 %1257
      %v1259 = vsel %vm663, %v907, 0.0
      %1260 = vadd.xlane.f32.xlu0 %v1259
      %v1261 = vpop.xlane.xlu0 %1260
      %v1262 = vsel %vm663, %v908, 0.0
      %1263 = vadd.xlane.f32.xlu0 %v1262
      %v1264 = vpop.xlane.xlu0 %1263
      %v1265 = vsel %vm663, %v909, 0.0
      %1266 = vadd.xlane.f32.xlu0 %v1265
      %v1267 = vpop.xlane.xlu0 %1266
      %v1268 = vsel %vm663, %v910, 0.0
      %1269 = vadd.xlane.f32.xlu0 %v1268
      %v1270 = vpop.xlane.xlu0 %1269
      %v1271 = vsel %vm663, %v911, 0.0
      %1272 = vadd.xlane.f32.xlu0 %v1271
      %v1273 = vpop.xlane.xlu0 %1272
      %v1274 = vsel %vm663, %v912, 0.0
      %1275 = vadd.xlane.f32.xlu0 %v1274
      %v1276 = vpop.xlane.xlu0 %1275
      %v1277 = vsel %vm663, %v913, 0.0
      %1278 = vadd.xlane.f32.xlu0 %v1277
      %v1279 = vpop.xlane.xlu0 %1278
      %v1280 = vsel %vm663, %v914, 0.0
      %1281 = vadd.xlane.f32.xlu0 %v1280
      %v1282 = vpop.xlane.xlu0 %1281
      %v1283 = vsel %vm663, %v915, 0.0
      %1284 = vadd.xlane.f32.xlu0 %v1283
      %v1285 = vpop.xlane.xlu0 %1284
      %v1286 = vsel %vm663, %v916, 0.0
      %1287 = vadd.xlane.f32.xlu0 %v1286
      %v1288 = vpop.xlane.xlu0 %1287
      %v1289 = vsel %vm663, %v917, 0.0
      %1290 = vadd.xlane.f32.xlu0 %v1289
      %v1291 = vpop.xlane.xlu0 %1290
      %v1292 = vsel %vm663, %v918, 0.0
      %1293 = vadd.xlane.f32.xlu0 %v1292
      %v1294 = vpop.xlane.xlu0 %1293
      %v1295 = vsel %vm663, %v919, 0.0
      %1296 = vadd.xlane.f32.xlu0 %v1295
      %v1297 = vpop.xlane.xlu0 %1296
      %v1298 = vsel %vm663, %v920, 0.0
      %1299 = vadd.xlane.f32.xlu0 %v1298
      %v1300 = vpop.xlane.xlu0 %1299
      %v1301 = vsel %vm663, %v921, 0.0
      %1302 = vadd.xlane.f32.xlu0 %v1301
      %v1303 = vpop.xlane.xlu0 %1302
      %v1304 = vsel %vm663, %v922, 0.0
      %1305 = vadd.xlane.f32.xlu0 %v1304
      %v1306 = vpop.xlane.xlu0 %1305
      %v1307 = vld [vmem:[%s1] sm:$0xff]
      %v1308 = vld [vmem:[%s1 + $0x8] sm:$0xff]
      %v1309 = vld [vmem:[%s1 + $0x10] sm:$0xff]
      %v1310 = vld [vmem:[%s1 + $0x18] sm:$0xff]
      %v1311 = vld [vmem:[%s1 + $0x20] sm:$0xff]
      %v1312 = vld [vmem:[%s1 + $0x28] sm:$0xff]
      %v1313 = vld [vmem:[%s1 + $0x30] sm:$0xff]
      %v1314 = vld [vmem:[%s1 + $0x38] sm:$0xff]
      %v1315 = vld [vmem:[%s1 + $0x40] sm:$0xff]
      %v1316 = vld [vmem:[%s1 + $0x48] sm:$0xff]
      %v1317 = vld [vmem:[%s1 + $0x50] sm:$0xff]
      %v1318 = vld [vmem:[%s1 + $0x58] sm:$0xff]
      %v1319 = vld [vmem:[%s1 + $0x60] sm:$0xff]
      %v1320 = vld [vmem:[%s1 + $0x68] sm:$0xff]
      %v1321 = vld [vmem:[%s1 + $0x70] sm:$0xff]
      %v1322 = vld [vmem:[%s1 + $0x78] sm:$0xff]
      %v1323 = vld [vmem:[%s2] sm:$0x1]
      %v1325 = vlaneseq
      %v1326 = vshrl.u32 %v1325, 7
      %v1327 = vsub.s32 0, %v1326
      %v1328 = vrot.slane %v1323, %v1327
      %v1458 = vlaneseq
      %v1459 = vand.u32 %v1458, 127
      %v1460 = vlaneseq
      %v1461 = vshrl.u32 %v1460, 7
      %v1462 = vsub.s32 %v1459, %v1461
      %v1463 = vrot.slane %v925, %v1462
      %v1464 = vadd.s32 %v1459, 4294967288
      %v1465 = vlaneseq
      %v1466 = vshrl.u32 %v1465, 7
      %v1467 = vsub.s32 %v1464, %v1466
      %v1468 = vrot.slane %v928, %v1467
      %vm1469 = vcmask 130112
      %v1470 = vsel %vm1469, %v1468, %v1463
      %v1471 = vadd.s32 %v1459, 4294967280
      %v1472 = vlaneseq
      %v1473 = vshrl.u32 %v1472, 7
      %v1474 = vsub.s32 %v1471, %v1473
      %v1475 = vrot.slane %v931, %v1474
      %vm1476 = vcmask 195712
      %v1477 = vsel %vm1476, %v1475, %v1470
      %v1478 = vadd.s32 %v1459, 4294967272
      %v1479 = vlaneseq
      %v1480 = vshrl.u32 %v1479, 7
      %v1481 = vsub.s32 %v1478, %v1480
      %v1482 = vrot.slane %v934, %v1481
      %vm1483 = vcmask 261312
      %v1484 = vsel %vm1483, %v1482, %v1477
      %v1485 = vadd.s32 %v1459, 4294967264
      %v1486 = vlaneseq
      %v1487 = vshrl.u32 %v1486, 7
      %v1488 = vsub.s32 %v1485, %v1487
      %v1489 = vrot.slane %v937, %v1488
      %vm1490 = vcmask 326912
      %v1491 = vsel %vm1490, %v1489, %v1484
      %v1492 = vadd.s32 %v1459, 4294967256
      %v1493 = vlaneseq
      %v1494 = vshrl.u32 %v1493, 7
      %v1495 = vsub.s32 %v1492, %v1494
      %v1496 = vrot.slane %v940, %v1495
      %vm1497 = vcmask 392512
      %v1498 = vsel %vm1497, %v1496, %v1491
      %v1499 = vadd.s32 %v1459, 4294967248
      %v1500 = vlaneseq
      %v1501 = vshrl.u32 %v1500, 7
      %v1502 = vsub.s32 %v1499, %v1501
      %v1503 = vrot.slane %v943, %v1502
      %vm1504 = vcmask 458112
      %v1505 = vsel %vm1504, %v1503, %v1498
      %v1506 = vadd.s32 %v1459, 4294967240
      %v1507 = vlaneseq
      %v1508 = vshrl.u32 %v1507, 7
      %v1509 = vsub.s32 %v1506, %v1508
      %v1510 = vrot.slane %v946, %v1509
      %vm1511 = vcmask 523712
      %v1512 = vsel %vm1511, %v1510, %v1505
      %v1513 = vadd.s32 %v1459, 4294967232
      %v1514 = vlaneseq
      %v1515 = vshrl.u32 %v1514, 7
      %v1516 = vsub.s32 %v1513, %v1515
      %v1517 = vrot.slane %v949, %v1516
      %vm1518 = vcmask 589312
      %v1519 = vsel %vm1518, %v1517, %v1512
      %v1520 = vadd.s32 %v1459, 4294967224
      %v1521 = vlaneseq
      %v1522 = vshrl.u32 %v1521, 7
      %v1523 = vsub.s32 %v1520, %v1522
      %v1524 = vrot.slane %v952, %v1523
      %vm1525 = vcmask 654912
      %v1526 = vsel %vm1525, %v1524, %v1519
      %v1527 = vadd.s32 %v1459, 4294967216
      %v1528 = vlaneseq
      %v1529 = vshrl.u32 %v1528, 7
      %v1530 = vsub.s32 %v1527, %v1529
      %v1531 = vrot.slane %v955, %v1530
      %vm1532 = vcmask 720512
      %v1533 = vsel %vm1532, %v1531, %v1526
      %v1534 = vadd.s32 %v1459, 4294967208
      %v1535 = vlaneseq
      %v1536 = vshrl.u32 %v1535, 7
      %v1537 = vsub.s32 %v1534, %v1536
      %v1538 = vrot.slane %v958, %v1537
      %vm1539 = vcmask 786112
      %v1540 = vsel %vm1539, %v1538, %v1533
      %v1541 = vadd.s32 %v1459, 4294967200
      %v1542 = vlaneseq
      %v1543 = vshrl.u32 %v1542, 7
      %v1544 = vsub.s32 %v1541, %v1543
      %v1545 = vrot.slane %v961, %v1544
      %vm1546 = vcmask 851712
      %v1547 = vsel %vm1546, %v1545, %v1540
      %v1548 = vadd.s32 %v1459, 4294967192
      %v1549 = vlaneseq
      %v1550 = vshrl.u32 %v1549, 7
      %v1551 = vsub.s32 %v1548, %v1550
      %v1552 = vrot.slane %v964, %v1551
      %vm1553 = vcmask 917312
      %v1554 = vsel %vm1553, %v1552, %v1547
      %v1555 = vadd.s32 %v1459, 4294967184
      %v1556 = vlaneseq
      %v1557 = vshrl.u32 %v1556, 7
      %v1558 = vsub.s32 %v1555, %v1557
      %v1559 = vrot.slane %v967, %v1558
      %vm1560 = vcmask 982912
      %v1561 = vsel %vm1560, %v1559, %v1554
      %v1562 = vadd.s32 %v1459, 4294967176
      %v1563 = vlaneseq
      %v1564 = vshrl.u32 %v1563, 7
      %v1565 = vsub.s32 %v1562, %v1564
      %v1566 = vrot.slane %v970, %v1565
      %vm1567 = vcmask 1048512
      %v1568 = vsel %vm1567, %v1566, %v1561
      %v1569 = vlaneseq
      %v1570 = vshrl.u32 %v1569, 7
      %v1571 = vsub.s32 %v1459, %v1570
      %v1572 = vrot.slane %v973, %v1571
      %v1573 = vlaneseq
      %v1574 = vshrl.u32 %v1573, 7
      %v1575 = vsub.s32 %v1464, %v1574
      %v1576 = vrot.slane %v976, %v1575
      %v1577 = vsel %vm1469, %v1576, %v1572
      %v1578 = vlaneseq
      %v1579 = vshrl.u32 %v1578, 7
      %v1580 = vsub.s32 %v1471, %v1579
      %v1581 = vrot.slane %v979, %v1580
      %v1582 = vsel %vm1476, %v1581, %v1577
      %v1583 = vlaneseq
      %v1584 = vshrl.u32 %v1583, 7
      %v1585 = vsub.s32 %v1478, %v1584
      %v1586 = vrot.slane %v982, %v1585
      %v1587 = vsel %vm1483, %v1586, %v1582
      %v1588 = vlaneseq
      %v1589 = vshrl.u32 %v1588, 7
      %v1590 = vsub.s32 %v1485, %v1589
      %v1591 = vrot.slane %v985, %v1590
      %v1592 = vsel %vm1490, %v1591, %v1587
      %v1593 = vlaneseq
      %v1594 = vshrl.u32 %v1593, 7
      %v1595 = vsub.s32 %v1492, %v1594
      %v1596 = vrot.slane %v988, %v1595
      %v1597 = vsel %vm1497, %v1596, %v1592
      %v1598 = vlaneseq
      %v1599 = vshrl.u32 %v1598, 7
      %v1600 = vsub.s32 %v1499, %v1599
      %v1601 = vrot.slane %v991, %v1600
      %v1602 = vsel %vm1504, %v1601, %v1597
      %v1603 = vlaneseq
      %v1604 = vshrl.u32 %v1603, 7
      %v1605 = vsub.s32 %v1506, %v1604
      %v1606 = vrot.slane %v994, %v1605
      %v1607 = vsel %vm1511, %v1606, %v1602
      %v1608 = vlaneseq
      %v1609 = vshrl.u32 %v1608, 7
      %v1610 = vsub.s32 %v1513, %v1609
      %v1611 = vrot.slane %v997, %v1610
      %v1612 = vsel %vm1518, %v1611, %v1607
      %v1613 = vlaneseq
      %v1614 = vshrl.u32 %v1613, 7
      %v1615 = vsub.s32 %v1520, %v1614
      %v1616 = vrot.slane %v1000, %v1615
      %v1617 = vsel %vm1525, %v1616, %v1612
      %v1618 = vlaneseq
      %v1619 = vshrl.u32 %v1618, 7
      %v1620 = vsub.s32 %v1527, %v1619
      %v1621 = vrot.slane %v1003, %v1620
      %v1622 = vsel %vm1532, %v1621, %v1617
      %v1623 = vlaneseq
      %v1624 = vshrl.u32 %v1623, 7
      %v1625 = vsub.s32 %v1534, %v1624
      %v1626 = vrot.slane %v1006, %v1625
      %v1627 = vsel %vm1539, %v1626, %v1622
      %v1628 = vlaneseq
      %v1629 = vshrl.u32 %v1628, 7
      %v1630 = vsub.s32 %v1541, %v1629
      %v1631 = vrot.slane %v1009, %v1630
      %v1632 = vsel %vm1546, %v1631, %v1627
      %v1633 = vlaneseq
      %v1634 = vshrl.u32 %v1633, 7
      %v1635 = vsub.s32 %v1548, %v1634
      %v1636 = vrot.slane %v1012, %v1635
      %v1637 = vsel %vm1553, %v1636, %v1632
      %v1638 = vlaneseq
      %v1639 = vshrl.u32 %v1638, 7
      %v1640 = vsub.s32 %v1555, %v1639
      %v1641 = vrot.slane %v1015, %v1640
      %v1642 = vsel %vm1560, %v1641, %v1637
      %v1643 = vlaneseq
      %v1644 = vshrl.u32 %v1643, 7
      %v1645 = vsub.s32 %v1562, %v1644
      %v1646 = vrot.slane %v1018, %v1645
      %v1647 = vsel %vm1567, %v1646, %v1642
      %v1648 = vlaneseq
      %v1649 = vshrl.u32 %v1648, 7
      %v1650 = vsub.s32 %v1459, %v1649
      %v1651 = vrot.slane %v1021, %v1650
      %v1652 = vlaneseq
      %v1653 = vshrl.u32 %v1652, 7
      %v1654 = vsub.s32 %v1464, %v1653
      %v1655 = vrot.slane %v1024, %v1654
      %v1656 = vsel %vm1469, %v1655, %v1651
      %v1657 = vlaneseq
      %v1658 = vshrl.u32 %v1657, 7
      %v1659 = vsub.s32 %v1471, %v1658
      %v1660 = vrot.slane %v1027, %v1659
      %v1661 = vsel %vm1476, %v1660, %v1656
      %v1662 = vlaneseq
      %v1663 = vshrl.u32 %v1662, 7
      %v1664 = vsub.s32 %v1478, %v1663
      %v1665 = vrot.slane %v1030, %v1664
      %v1666 = vsel %vm1483, %v1665, %v1661
      %v1667 = vlaneseq
      %v1668 = vshrl.u32 %v1667, 7
      %v1669 = vsub.s32 %v1485, %v1668
      %v1670 = vrot.slane %v1033, %v1669
      %v1671 = vsel %vm1490, %v1670, %v1666
      %v1672 = vlaneseq
      %v1673 = vshrl.u32 %v1672, 7
      %v1674 = vsub.s32 %v1492, %v1673
      %v1675 = vrot.slane %v1036, %v1674
      %v1676 = vsel %vm1497, %v1675, %v1671
      %v1677 = vlaneseq
      %v1678 = vshrl.u32 %v1677, 7
      %v1679 = vsub.s32 %v1499, %v1678
      %v1680 = vrot.slane %v1039, %v1679
      %v1681 = vsel %vm1504, %v1680, %v1676
      %v1682 = vlaneseq
      %v1683 = vshrl.u32 %v1682, 7
      %v1684 = vsub.s32 %v1506, %v1683
      %v1685 = vrot.slane %v1042, %v1684
      %v1686 = vsel %vm1511, %v1685, %v1681
      %v1687 = vlaneseq
      %v1688 = vshrl.u32 %v1687, 7
      %v1689 = vsub.s32 %v1513, %v1688
      %v1690 = vrot.slane %v1045, %v1689
      %v1691 = vsel %vm1518, %v1690, %v1686
      %v1692 = vlaneseq
      %v1693 = vshrl.u32 %v1692, 7
      %v1694 = vsub.s32 %v1520, %v1693
      %v1695 = vrot.slane %v1048, %v1694
      %v1696 = vsel %vm1525, %v1695, %v1691
      %v1697 = vlaneseq
      %v1698 = vshrl.u32 %v1697, 7
      %v1699 = vsub.s32 %v1527, %v1698
      %v1700 = vrot.slane %v1051, %v1699
      %v1701 = vsel %vm1532, %v1700, %v1696
      %v1702 = vlaneseq
      %v1703 = vshrl.u32 %v1702, 7
      %v1704 = vsub.s32 %v1534, %v1703
      %v1705 = vrot.slane %v1054, %v1704
      %v1706 = vsel %vm1539, %v1705, %v1701
      %v1707 = vlaneseq
      %v1708 = vshrl.u32 %v1707, 7
      %v1709 = vsub.s32 %v1541, %v1708
      %v1710 = vrot.slane %v1057, %v1709
      %v1711 = vsel %vm1546, %v1710, %v1706
      %v1712 = vlaneseq
      %v1713 = vshrl.u32 %v1712, 7
      %v1714 = vsub.s32 %v1548, %v1713
      %v1715 = vrot.slane %v1060, %v1714
      %v1716 = vsel %vm1553, %v1715, %v1711
      %v1717 = vlaneseq
      %v1718 = vshrl.u32 %v1717, 7
      %v1719 = vsub.s32 %v1555, %v1718
      %v1720 = vrot.slane %v1063, %v1719
      %v1721 = vsel %vm1560, %v1720, %v1716
      %v1722 = vlaneseq
      %v1723 = vshrl.u32 %v1722, 7
      %v1724 = vsub.s32 %v1562, %v1723
      %v1725 = vrot.slane %v1066, %v1724
      %v1726 = vsel %vm1567, %v1725, %v1721
      %v1727 = vlaneseq
      %v1728 = vshrl.u32 %v1727, 7
      %v1729 = vsub.s32 %v1459, %v1728
      %v1730 = vrot.slane %v1069, %v1729
      %v1731 = vlaneseq
      %v1732 = vshrl.u32 %v1731, 7
      %v1733 = vsub.s32 %v1464, %v1732
      %v1734 = vrot.slane %v1072, %v1733
      %v1735 = vsel %vm1469, %v1734, %v1730
      %v1736 = vlaneseq
      %v1737 = vshrl.u32 %v1736, 7
      %v1738 = vsub.s32 %v1471, %v1737
      %v1739 = vrot.slane %v1075, %v1738
      %v1740 = vsel %vm1476, %v1739, %v1735
      %v1741 = vlaneseq
      %v1742 = vshrl.u32 %v1741, 7
      %v1743 = vsub.s32 %v1478, %v1742
      %v1744 = vrot.slane %v1078, %v1743
      %v1745 = vsel %vm1483, %v1744, %v1740
      %v1746 = vlaneseq
      %v1747 = vshrl.u32 %v1746, 7
      %v1748 = vsub.s32 %v1485, %v1747
      %v1749 = vrot.slane %v1081, %v1748
      %v1750 = vsel %vm1490, %v1749, %v1745
      %v1751 = vlaneseq
      %v1752 = vshrl.u32 %v1751, 7
      %v1753 = vsub.s32 %v1492, %v1752
      %v1754 = vrot.slane %v1084, %v1753
      %v1755 = vsel %vm1497, %v1754, %v1750
      %v1756 = vlaneseq
      %v1757 = vshrl.u32 %v1756, 7
      %v1758 = vsub.s32 %v1499, %v1757
      %v1759 = vrot.slane %v1087, %v1758
      %v1760 = vsel %vm1504, %v1759, %v1755
      %v1761 = vlaneseq
      %v1762 = vshrl.u32 %v1761, 7
      %v1763 = vsub.s32 %v1506, %v1762
      %v1764 = vrot.slane %v1090, %v1763
      %v1765 = vsel %vm1511, %v1764, %v1760
      %v1766 = vlaneseq
      %v1767 = vshrl.u32 %v1766, 7
      %v1768 = vsub.s32 %v1513, %v1767
      %v1769 = vrot.slane %v1093, %v1768
      %v1770 = vsel %vm1518, %v1769, %v1765
      %v1771 = vlaneseq
      %v1772 = vshrl.u32 %v1771, 7
      %v1773 = vsub.s32 %v1520, %v1772
      %v1774 = vrot.slane %v1096, %v1773
      %v1775 = vsel %vm1525, %v1774, %v1770
      %v1776 = vlaneseq
      %v1777 = vshrl.u32 %v1776, 7
      %v1778 = vsub.s32 %v1527, %v1777
      %v1779 = vrot.slane %v1099, %v1778
      %v1780 = vsel %vm1532, %v1779, %v1775
      %v1781 = vlaneseq
      %v1782 = vshrl.u32 %v1781, 7
      %v1783 = vsub.s32 %v1534, %v1782
      %v1784 = vrot.slane %v1102, %v1783
      %v1785 = vsel %vm1539, %v1784, %v1780
      %v1786 = vlaneseq
      %v1787 = vshrl.u32 %v1786, 7
      %v1788 = vsub.s32 %v1541, %v1787
      %v1789 = vrot.slane %v1105, %v1788
      %v1790 = vsel %vm1546, %v1789, %v1785
      %v1791 = vlaneseq
      %v1792 = vshrl.u32 %v1791, 7
      %v1793 = vsub.s32 %v1548, %v1792
      %v1794 = vrot.slane %v1108, %v1793
      %v1795 = vsel %vm1553, %v1794, %v1790
      %v1796 = vlaneseq
      %v1797 = vshrl.u32 %v1796, 7
      %v1798 = vsub.s32 %v1555, %v1797
      %v1799 = vrot.slane %v1111, %v1798
      %v1800 = vsel %vm1560, %v1799, %v1795
      %v1801 = vlaneseq
      %v1802 = vshrl.u32 %v1801, 7
      %v1803 = vsub.s32 %v1562, %v1802
      %v1804 = vrot.slane %v1114, %v1803
      %v1805 = vsel %vm1567, %v1804, %v1800
      %v1806 = vlaneseq
      %v1807 = vshrl.u32 %v1806, 7
      %v1808 = vsub.s32 %v1459, %v1807
      %v1809 = vrot.slane %v1117, %v1808
      %v1810 = vlaneseq
      %v1811 = vshrl.u32 %v1810, 7
      %v1812 = vsub.s32 %v1464, %v1811
      %v1813 = vrot.slane %v1120, %v1812
      %v1814 = vsel %vm1469, %v1813, %v1809
      %v1815 = vlaneseq
      %v1816 = vshrl.u32 %v1815, 7
      %v1817 = vsub.s32 %v1471, %v1816
      %v1818 = vrot.slane %v1123, %v1817
      %v1819 = vsel %vm1476, %v1818, %v1814
      %v1820 = vlaneseq
      %v1821 = vshrl.u32 %v1820, 7
      %v1822 = vsub.s32 %v1478, %v1821
      %v1823 = vrot.slane %v1126, %v1822
      %v1824 = vsel %vm1483, %v1823, %v1819
      %v1825 = vlaneseq
      %v1826 = vshrl.u32 %v1825, 7
      %v1827 = vsub.s32 %v1485, %v1826
      %v1828 = vrot.slane %v1129, %v1827
      %v1829 = vsel %vm1490, %v1828, %v1824
      %v1830 = vlaneseq
      %v1831 = vshrl.u32 %v1830, 7
      %v1832 = vsub.s32 %v1492, %v1831
      %v1833 = vrot.slane %v1132, %v1832
      %v1834 = vsel %vm1497, %v1833, %v1829
      %v1835 = vlaneseq
      %v1836 = vshrl.u32 %v1835, 7
      %v1837 = vsub.s32 %v1499, %v1836
      %v1838 = vrot.slane %v1135, %v1837
      %v1839 = vsel %vm1504, %v1838, %v1834
      %v1840 = vlaneseq
      %v1841 = vshrl.u32 %v1840, 7
      %v1842 = vsub.s32 %v1506, %v1841
      %v1843 = vrot.slane %v1138, %v1842
      %v1844 = vsel %vm1511, %v1843, %v1839
      %v1845 = vlaneseq
      %v1846 = vshrl.u32 %v1845, 7
      %v1847 = vsub.s32 %v1513, %v1846
      %v1848 = vrot.slane %v1141, %v1847
      %v1849 = vsel %vm1518, %v1848, %v1844
      %v1850 = vlaneseq
      %v1851 = vshrl.u32 %v1850, 7
      %v1852 = vsub.s32 %v1520, %v1851
      %v1853 = vrot.slane %v1144, %v1852
      %v1854 = vsel %vm1525, %v1853, %v1849
      %v1855 = vlaneseq
      %v1856 = vshrl.u32 %v1855, 7
      %v1857 = vsub.s32 %v1527, %v1856
      %v1858 = vrot.slane %v1147, %v1857
      %v1859 = vsel %vm1532, %v1858, %v1854
      %v1860 = vlaneseq
      %v1861 = vshrl.u32 %v1860, 7
      %v1862 = vsub.s32 %v1534, %v1861
      %v1863 = vrot.slane %v1150, %v1862
      %v1864 = vsel %vm1539, %v1863, %v1859
      %v1865 = vlaneseq
      %v1866 = vshrl.u32 %v1865, 7
      %v1867 = vsub.s32 %v1541, %v1866
      %v1868 = vrot.slane %v1153, %v1867
      %v1869 = vsel %vm1546, %v1868, %v1864
      %v1870 = vlaneseq
      %v1871 = vshrl.u32 %v1870, 7
      %v1872 = vsub.s32 %v1548, %v1871
      %v1873 = vrot.slane %v1156, %v1872
      %v1874 = vsel %vm1553, %v1873, %v1869
      %v1875 = vlaneseq
      %v1876 = vshrl.u32 %v1875, 7
      %v1877 = vsub.s32 %v1555, %v1876
      %v1878 = vrot.slane %v1159, %v1877
      %v1879 = vsel %vm1560, %v1878, %v1874
      %v1880 = vlaneseq
      %v1881 = vshrl.u32 %v1880, 7
      %v1882 = vsub.s32 %v1562, %v1881
      %v1883 = vrot.slane %v1162, %v1882
      %v1884 = vsel %vm1567, %v1883, %v1879
      %v1885 = vlaneseq
      %v1886 = vshrl.u32 %v1885, 7
      %v1887 = vsub.s32 %v1459, %v1886
      %v1888 = vrot.slane %v1165, %v1887
      %v1889 = vlaneseq
      %v1890 = vshrl.u32 %v1889, 7
      %v1891 = vsub.s32 %v1464, %v1890
      %v1892 = vrot.slane %v1168, %v1891
      %v1893 = vsel %vm1469, %v1892, %v1888
      %v1894 = vlaneseq
      %v1895 = vshrl.u32 %v1894, 7
      %v1896 = vsub.s32 %v1471, %v1895
      %v1897 = vrot.slane %v1171, %v1896
      %v1898 = vsel %vm1476, %v1897, %v1893
      %v1899 = vlaneseq
      %v1900 = vshrl.u32 %v1899, 7
      %v1901 = vsub.s32 %v1478, %v1900
      %v1902 = vrot.slane %v1174, %v1901
      %v1903 = vsel %vm1483, %v1902, %v1898
      %v1904 = vlaneseq
      %v1905 = vshrl.u32 %v1904, 7
      %v1906 = vsub.s32 %v1485, %v1905
      %v1907 = vrot.slane %v1177, %v1906
      %v1908 = vsel %vm1490, %v1907, %v1903
      %v1909 = vlaneseq
      %v1910 = vshrl.u32 %v1909, 7
      %v1911 = vsub.s32 %v1492, %v1910
      %v1912 = vrot.slane %v1180, %v1911
      %v1913 = vsel %vm1497, %v1912, %v1908
      %v1914 = vlaneseq
      %v1915 = vshrl.u32 %v1914, 7
      %v1916 = vsub.s32 %v1499, %v1915
      %v1917 = vrot.slane %v1183, %v1916
      %v1918 = vsel %vm1504, %v1917, %v1913
      %v1919 = vlaneseq
      %v1920 = vshrl.u32 %v1919, 7
      %v1921 = vsub.s32 %v1506, %v1920
      %v1922 = vrot.slane %v1186, %v1921
      %v1923 = vsel %vm1511, %v1922, %v1918
      %v1924 = vlaneseq
      %v1925 = vshrl.u32 %v1924, 7
      %v1926 = vsub.s32 %v1513, %v1925
      %v1927 = vrot.slane %v1189, %v1926
      %v1928 = vsel %vm1518, %v1927, %v1923
      %v1929 = vlaneseq
      %v1930 = vshrl.u32 %v1929, 7
      %v1931 = vsub.s32 %v1520, %v1930
      %v1932 = vrot.slane %v1192, %v1931
      %v1933 = vsel %vm1525, %v1932, %v1928
      %v1934 = vlaneseq
      %v1935 = vshrl.u32 %v1934, 7
      %v1936 = vsub.s32 %v1527, %v1935
      %v1937 = vrot.slane %v1195, %v1936
      %v1938 = vsel %vm1532, %v1937, %v1933
      %v1939 = vlaneseq
      %v1940 = vshrl.u32 %v1939, 7
      %v1941 = vsub.s32 %v1534, %v1940
      %v1942 = vrot.slane %v1198, %v1941
      %v1943 = vsel %vm1539, %v1942, %v1938
      %v1944 = vlaneseq
      %v1945 = vshrl.u32 %v1944, 7
      %v1946 = vsub.s32 %v1541, %v1945
      %v1947 = vrot.slane %v1201, %v1946
      %v1948 = vsel %vm1546, %v1947, %v1943
      %v1949 = vlaneseq
      %v1950 = vshrl.u32 %v1949, 7
      %v1951 = vsub.s32 %v1548, %v1950
      %v1952 = vrot.slane %v1204, %v1951
      %v1953 = vsel %vm1553, %v1952, %v1948
      %v1954 = vlaneseq
      %v1955 = vshrl.u32 %v1954, 7
      %v1956 = vsub.s32 %v1555, %v1955
      %v1957 = vrot.slane %v1207, %v1956
      %v1958 = vsel %vm1560, %v1957, %v1953
      %v1959 = vlaneseq
      %v1960 = vshrl.u32 %v1959, 7
      %v1961 = vsub.s32 %v1562, %v1960
      %v1962 = vrot.slane %v1210, %v1961
      %v1963 = vsel %vm1567, %v1962, %v1958
      %v1964 = vlaneseq
      %v1965 = vshrl.u32 %v1964, 7
      %v1966 = vsub.s32 %v1459, %v1965
      %v1967 = vrot.slane %v1213, %v1966
      %v1968 = vlaneseq
      %v1969 = vshrl.u32 %v1968, 7
      %v1970 = vsub.s32 %v1464, %v1969
      %v1971 = vrot.slane %v1216, %v1970
      %v1972 = vsel %vm1469, %v1971, %v1967
      %v1973 = vlaneseq
      %v1974 = vshrl.u32 %v1973, 7
      %v1975 = vsub.s32 %v1471, %v1974
      %v1976 = vrot.slane %v1219, %v1975
      %v1977 = vsel %vm1476, %v1976, %v1972
      %v1978 = vlaneseq
      %v1979 = vshrl.u32 %v1978, 7
      %v1980 = vsub.s32 %v1478, %v1979
      %v1981 = vrot.slane %v1222, %v1980
      %v1982 = vsel %vm1483, %v1981, %v1977
      %v1983 = vlaneseq
      %v1984 = vshrl.u32 %v1983, 7
      %v1985 = vsub.s32 %v1485, %v1984
      %v1986 = vrot.slane %v1225, %v1985
      %v1987 = vsel %vm1490, %v1986, %v1982
      %v1988 = vlaneseq
      %v1989 = vshrl.u32 %v1988, 7
      %v1990 = vsub.s32 %v1492, %v1989
      %v1991 = vrot.slane %v1228, %v1990
      %v1992 = vsel %vm1497, %v1991, %v1987
      %v1993 = vlaneseq
      %v1994 = vshrl.u32 %v1993, 7
      %v1995 = vsub.s32 %v1499, %v1994
      %v1996 = vrot.slane %v1231, %v1995
      %v1997 = vsel %vm1504, %v1996, %v1992
      %v1998 = vlaneseq
      %v1999 = vshrl.u32 %v1998, 7
      %v2000 = vsub.s32 %v1506, %v1999
      %v2001 = vrot.slane %v1234, %v2000
      %v2002 = vsel %vm1511, %v2001, %v1997
      %v2003 = vlaneseq
      %v2004 = vshrl.u32 %v2003, 7
      %v2005 = vsub.s32 %v1513, %v2004
      %v2006 = vrot.slane %v1237, %v2005
      %v2007 = vsel %vm1518, %v2006, %v2002
      %v2008 = vlaneseq
      %v2009 = vshrl.u32 %v2008, 7
      %v2010 = vsub.s32 %v1520, %v2009
      %v2011 = vrot.slane %v1240, %v2010
      %v2012 = vsel %vm1525, %v2011, %v2007
      %v2013 = vlaneseq
      %v2014 = vshrl.u32 %v2013, 7
      %v2015 = vsub.s32 %v1527, %v2014
      %v2016 = vrot.slane %v1243, %v2015
      %v2017 = vsel %vm1532, %v2016, %v2012
      %v2018 = vlaneseq
      %v2019 = vshrl.u32 %v2018, 7
      %v2020 = vsub.s32 %v1534, %v2019
      %v2021 = vrot.slane %v1246, %v2020
      %v2022 = vsel %vm1539, %v2021, %v2017
      %v2023 = vlaneseq
      %v2024 = vshrl.u32 %v2023, 7
      %v2025 = vsub.s32 %v1541, %v2024
      %v2026 = vrot.slane %v1249, %v2025
      %v2027 = vsel %vm1546, %v2026, %v2022
      %v2028 = vlaneseq
      %v2029 = vshrl.u32 %v2028, 7
      %v2030 = vsub.s32 %v1548, %v2029
      %v2031 = vrot.slane %v1252, %v2030
      %v2032 = vsel %vm1553, %v2031, %v2027
      %v2033 = vlaneseq
      %v2034 = vshrl.u32 %v2033, 7
      %v2035 = vsub.s32 %v1555, %v2034
      %v2036 = vrot.slane %v1255, %v2035
      %v2037 = vsel %vm1560, %v2036, %v2032
      %v2038 = vlaneseq
      %v2039 = vshrl.u32 %v2038, 7
      %v2040 = vsub.s32 %v1562, %v2039
      %v2041 = vrot.slane %v1258, %v2040
      %v2042 = vsel %vm1567, %v2041, %v2037
      %v2043 = vlaneseq
      %v2044 = vshrl.u32 %v2043, 7
      %v2045 = vsub.s32 %v1459, %v2044
      %v2046 = vrot.slane %v1261, %v2045
      %v2047 = vlaneseq
      %v2048 = vshrl.u32 %v2047, 7
      %v2049 = vsub.s32 %v1464, %v2048
      %v2050 = vrot.slane %v1264, %v2049
      %v2051 = vsel %vm1469, %v2050, %v2046
      %v2052 = vlaneseq
      %v2053 = vshrl.u32 %v2052, 7
      %v2054 = vsub.s32 %v1471, %v2053
      %v2055 = vrot.slane %v1267, %v2054
      %v2056 = vsel %vm1476, %v2055, %v2051
      %v2057 = vlaneseq
      %v2058 = vshrl.u32 %v2057, 7
      %v2059 = vsub.s32 %v1478, %v2058
      %v2060 = vrot.slane %v1270, %v2059
      %v2061 = vsel %vm1483, %v2060, %v2056
      %v2062 = vlaneseq
      %v2063 = vshrl.u32 %v2062, 7
      %v2064 = vsub.s32 %v1485, %v2063
      %v2065 = vrot.slane %v1273, %v2064
      %v2066 = vsel %vm1490, %v2065, %v2061
      %v2067 = vlaneseq
      %v2068 = vshrl.u32 %v2067, 7
      %v2069 = vsub.s32 %v1492, %v2068
      %v2070 = vrot.slane %v1276, %v2069
      %v2071 = vsel %vm1497, %v2070, %v2066
      %v2072 = vlaneseq
      %v2073 = vshrl.u32 %v2072, 7
      %v2074 = vsub.s32 %v1499, %v2073
      %v2075 = vrot.slane %v1279, %v2074
      %v2076 = vsel %vm1504, %v2075, %v2071
      %v2077 = vlaneseq
      %v2078 = vshrl.u32 %v2077, 7
      %v2079 = vsub.s32 %v1506, %v2078
      %v2080 = vrot.slane %v1282, %v2079
      %v2081 = vsel %vm1511, %v2080, %v2076
      %v2082 = vlaneseq
      %v2083 = vshrl.u32 %v2082, 7
      %v2084 = vsub.s32 %v1513, %v2083
      %v2085 = vrot.slane %v1285, %v2084
      %v2086 = vsel %vm1518, %v2085, %v2081
      %v2087 = vlaneseq
      %v2088 = vshrl.u32 %v2087, 7
      %v2089 = vsub.s32 %v1520, %v2088
      %v2090 = vrot.slane %v1288, %v2089
      %v2091 = vsel %vm1525, %v2090, %v2086
      %v2092 = vlaneseq
      %v2093 = vshrl.u32 %v2092, 7
      %v2094 = vsub.s32 %v1527, %v2093
      %v2095 = vrot.slane %v1291, %v2094
      %v2096 = vsel %vm1532, %v2095, %v2091
      %v2097 = vlaneseq
      %v2098 = vshrl.u32 %v2097, 7
      %v2099 = vsub.s32 %v1534, %v2098
      %v2100 = vrot.slane %v1294, %v2099
      %v2101 = vsel %vm1539, %v2100, %v2096
      %v2102 = vlaneseq
      %v2103 = vshrl.u32 %v2102, 7
      %v2104 = vsub.s32 %v1541, %v2103
      %v2105 = vrot.slane %v1297, %v2104
      %v2106 = vsel %vm1546, %v2105, %v2101
      %v2107 = vlaneseq
      %v2108 = vshrl.u32 %v2107, 7
      %v2109 = vsub.s32 %v1548, %v2108
      %v2110 = vrot.slane %v1300, %v2109
      %v2111 = vsel %vm1553, %v2110, %v2106
      %v2112 = vlaneseq
      %v2113 = vshrl.u32 %v2112, 7
      %v2114 = vsub.s32 %v1555, %v2113
      %v2115 = vrot.slane %v1303, %v2114
      %v2116 = vsel %vm1560, %v2115, %v2111
      %v2117 = vlaneseq
      %v2118 = vshrl.u32 %v2117, 7
      %v2119 = vsub.s32 %v1562, %v2118
      %v2120 = vrot.slane %v1306, %v2119
      %v2121 = vsel %vm1567, %v2120, %v2116
      %vm2122 = vcmask 1041409
      %v2123 = vsel %vm2122, %v1647, %v1568
      %vm2124 = vcmask 1042434
      %v2125 = vsel %vm2124, %v1726, %v2123
      %vm2126 = vcmask 1043459
      %v2127 = vsel %vm2126, %v1805, %v2125
      %vm2128 = vcmask 1044484
      %v2129 = vsel %vm2128, %v1884, %v2127
      %vm2130 = vcmask 1045509
      %v2131 = vsel %vm2130, %v1963, %v2129
      %vm2132 = vcmask 1046534
      %v2133 = vsel %vm2132, %v2042, %v2131
      %vm2134 = vcmask 1047559
      %v2135 = vsel %vm2134, %v2121, %v2133
      %2137 = vmatprep.subr.mxu0 0.0
      %2138 = vmatpush1.msra.mxu0 %v1322
      %2139 = vmatprep.subr.mxu0 0.0
      %2140 = vmatpush1.msra.mxu0 %v1321
      %2141 = vmatprep.subr.mxu0 0.0
      %2142 = vmatpush1.msra.mxu0 %v1320
      %2143 = vmatprep.subr.mxu0 0.0
      %2144 = vmatpush1.msra.mxu0 %v1319
      %2145 = vmatprep.subr.mxu0 0.0
      %2146 = vmatpush1.msra.mxu0 %v1318
      %2147 = vmatprep.subr.mxu0 0.0
      %2148 = vmatpush1.msra.mxu0 %v1317
      %2149 = vmatprep.subr.mxu0 0.0
      %2150 = vmatpush1.msra.mxu0 %v1316
      %2151 = vmatprep.subr.mxu0 0.0
      %2152 = vmatpush1.msra.mxu0 %v1315
      %2153 = vmatprep.subr.mxu0 0.0
      %2154 = vmatpush1.msra.mxu0 %v1314
      %2155 = vmatprep.subr.mxu0 0.0
      %2156 = vmatpush1.msra.mxu0 %v1313
      %2157 = vmatprep.subr.mxu0 0.0
      %2158 = vmatpush1.msra.mxu0 %v1312
      %2159 = vmatprep.subr.mxu0 0.0
      %2160 = vmatpush1.msra.mxu0 %v1311
      %2161 = vmatprep.subr.mxu0 0.0
      %2162 = vmatpush1.msra.mxu0 %v1310
      %2163 = vmatprep.subr.mxu0 0.0
      %2164 = vmatpush1.msra.mxu0 %v1309
      %2165 = vmatprep.subr.mxu0 0.0
      %2166 = vmatpush1.msra.mxu0 %v1308
      %2167 = vmatprep.subr.mxu0 0.0
      %2168 = vmatpush1.msra.mxu0 %v1307
      %2169 = vmatprep.subr.mxu0 0.0
      %2170 = vmatpush2.msra.mxu0 0.0
      %2171 = vmatprep.subr.mxu0 0.0
      %2172 = vmatpush2.msra.mxu0 0.0
      %2173 = vmatprep.subr.mxu0 0.0
      %2174 = vmatpush2.msra.mxu0 0.0
      %2175 = vmatprep.subr.mxu0 0.0
      %2176 = vmatpush2.msra.mxu0 0.0
      %2177 = vmatprep.subr.mxu0 0.0
      %2178 = vmatpush2.msra.mxu0 0.0
      %2179 = vmatprep.subr.mxu0 0.0
      %2180 = vmatpush2.msra.mxu0 0.0
      %2181 = vmatprep.subr.mxu0 0.0
      %2182 = vmatpush2.msra.mxu0 0.0
      %2183 = vmatprep.subr.mxu0 0.0
      %2184 = vmatpush2.msra.mxu0 0.0
      %2185 = vmatprep.subr.mxu0 0.0
      %2186 = vmatpush2.msra.mxu0 0.0
      %2187 = vmatprep.subr.mxu0 0.0
      %2188 = vmatpush2.msra.mxu0 0.0
      %2189 = vmatprep.subr.mxu0 0.0
      %2190 = vmatpush2.msra.mxu0 0.0
      %2191 = vmatprep.subr.mxu0 0.0
      %2192 = vmatpush2.msra.mxu0 0.0
      %2193 = vmatprep.subr.mxu0 0.0
      %2194 = vmatpush2.msra.mxu0 0.0
      %2195 = vmatprep.subr.mxu0 0.0
      %2196 = vmatpush2.msra.mxu0 0.0
      %2197 = vmatprep.subr.mxu0 0.0
      %2198 = vmatpush2.msra.mxu0 0.0
      %2199 = vmatprep.subr.mxu0 0.0
      %2200 = vmatpush2.msra.mxu0 0.0
      %2201 = vmatprep.mubr.f32.mxu0 0.0
      %2202 = vmatmul.mubr.f32.gmra.mxu0 %v2135
      %v2203 = vpop.f32.mrf.mxu0
      %v2204 = vadd.f32 %v1328, %v2203
      %v2205 = vpop.f32.mrf.mxu0
      %2206 = vdwg.mxu0
      %vm2207 = vcmp.lt.s32.totalorder %v1459, 2
      %v2208 = vsel %vm2207, %v2204, -inf
      %2209 = vmax.xlane.f32.xlu0 %v2208
      %v2210 = vpop.xlane.xlu0 %2209
      %v2211 = vsub.f32 %v2208, %v2210
      %v2212 = vmul.f32 %v2211, 1.442695
      %v2213 = vpow.pop %v2212
      %2214 = vadd.xlane.f32.xlu0 %v2213
      %v2215 = vpop.xlane.xlu0 %2214
      %v2216 = vrcp.pop %v2215
      %v2217 = vmul.f32 %v2213, %v2216
      %2218 = vst [vmem:[#allocation5] sm:$0xff] %v2204
      %2219 = vst [vmem:[#allocation3] sm:$0xff] %v2217
    $region21: #{tpu_custom_call.1} parent=1 // pred_fallthru
      _
    // Predicated region
    $region22: #{tpu_custom_call.1} parent=1 // pred_check
      _
    $region23: #{tpu_custom_call.1} parent=1 // pred_check_branch
      %2221 = sbr.rel (0) target = $region25
    $region24: #{tpu_custom_call.1} parent=1 // pred_region
      %s2223 = ssub.s32 128, 128
      %2224 = vsyncadd [#allocation4], %s2223
      %s2226 = sshll.u32 [#allocation3], 4
      %s2227 = int_to_ptr.vmem [resolvable:$true] %s2226
      %2229 = dma.vmem_to_hbm [thread:$0]  %s2227, 128, %s3, [#allocation4]
    $region25: #{tpu_custom_call.1} parent=1 // pred_fallthru
      _
    // Predicated region
    $region26: #{tpu_custom_call.1} parent=1 // pred_check
      _
    $region27: #{tpu_custom_call.1} parent=1 // pred_check_branch
      %2231 = sbr.rel (0) target = $region29
    $region28: #{tpu_custom_call.1} parent=1 // pred_region
      %s2233 = ssub.s32 128, 128
      %2234 = vsyncadd [#allocation6], %s2233
      %s2236 = sshll.u32 [#allocation5], 4
      %s2237 = int_to_ptr.vmem [resolvable:$true] %s2236
      %2239 = dma.vmem_to_hbm [thread:$0]  %s2237, 128, %s4, [#allocation6]
    $region29: #{tpu_custom_call.1} parent=1 // pred_fallthru
      _
    // Predicated region
    $region30: #{tpu_custom_call.1} parent=1 // pred_check
      _
    $region31: #{tpu_custom_call.1} parent=1 // pred_check_branch
      %2241 = sbr.rel (0) target = $region33
    $region32: #{tpu_custom_call.1} parent=1 // pred_region
      %2242 = dma.done [#allocation4], 128
    $region33: #{tpu_custom_call.1} parent=1 // pred_fallthru
      _
    // Predicated region
    $region34: #{tpu_custom_call.1} parent=1 // pred_check
      _
    $region35: #{tpu_custom_call.1} parent=1 // pred_check_branch
      %2244 = sbr.rel (0) target = $region37
    $region36: #{tpu_custom_call.1} parent=1 // pred_region
      %2245 = dma.done [#allocation6], 128
    $region37: #{tpu_custom_call.1} parent=1 // pred_fallthru
      _
    %2246 = vsyncpa [#allocation4], 1
    %2247 = vsyncpa [#allocation6], 1

</llo_original>
